<compile_context>
chip_gen: v5e
topology: v5e:2x2
jax: 0.10.0
libtpu: 0.0.40
codegen_flags: <defaults>
</compile_context>

<pallas_src>
import functools

import jax
import jax.numpy as jnp
from jax import lax
from jax.experimental import pallas as pl
from jax.experimental.pallas import tpu as pltpu

LANE = 128


# ----------------------------------------------------------------------------
# Small helpers (host-side layout plumbing).
# ----------------------------------------------------------------------------
def _round_up(v, m):
    return (v + m - 1) // m * m


def _pad2(a, rows, cols, dtype):
    a = a.astype(dtype)
    return jnp.pad(a, ((0, rows - a.shape[0]), (0, cols - a.shape[1])))


def _row_tile(n, target=256):
    # Largest "nice" row tile that divides n (multiple of 8, <= target).
    for t in (target, 128, 64, 32, 16, 8):
        if t <= n and n % t == 0:
            return t
    return n  # full dim (exempt from the (8,128) rule)


def _k_tile(n):
    # K (adj column) tile: multiple of 128 keeps bf16 blocks layout-friendly.
    for t in (512, 256, 128):
        if t <= n and n % t == 0:
            return t
    return n


# ----------------------------------------------------------------------------
# Kernel 1: support = x @ W   (hoisted out of the adj row loop)
# ----------------------------------------------------------------------------
def _support_kernel(x_ref, w_ref, o_ref):
    o_ref[...] = jnp.dot(
        x_ref[...], w_ref[...], preferred_element_type=jnp.float32
    ).astype(o_ref.dtype)


def support_matmul(x, w, *, out_dtype=jnp.bfloat16):
    n, f = x.shape
    h = w.shape[1]
    tm = _row_tile(n)
    return pl.pallas_call(
        _support_kernel,
        out_shape=jax.ShapeDtypeStruct((n, h), out_dtype),
        grid_spec=pltpu.PrefetchScalarGridSpec(
            num_scalar_prefetch=0,
            grid=(n // tm,),
            in_specs=[
                pl.BlockSpec((tm, f), lambda i: (i, 0)),   # x row tile
                pl.BlockSpec((f, h), lambda i: (0, 0)),    # W (full, small)
            ],
            out_specs=pl.BlockSpec((tm, h), lambda i: (i, 0)),
        ),
        compiler_params=pltpu.CompilerParams(dimension_semantics=("parallel",)),
    )(x, w)


# ----------------------------------------------------------------------------
# Kernel 2: gc1 + ReLU fused with the next layer's support matmul:
#   out = relu(adj @ support1 + b1) @ [W2 | W3]
# K-tiled reduction over adj columns with an f32 VMEM accumulator.
# ----------------------------------------------------------------------------
def _gc1_fused_kernel(support_ref, b_ref, wnext_ref, adj_ref, o_ref, acc_ref):
    k = pl.program_id(1)

    @pl.when(k == 0)
    def _():
        acc_ref[...] = jnp.zeros_like(acc_ref)

    acc_ref[...] += jnp.dot(
        adj_ref[...], support_ref[...], preferred_element_type=jnp.float32
    )

    @pl.when(k == pl.num_programs(1) - 1)
    def _():
        h = jnp.maximum(acc_ref[...] + b_ref[...], 0.0)
        # TODO(synk): dropout is identity in eval mode (training=False), so omitted.
        s_next = jnp.dot(
            h.astype(wnext_ref.dtype), wnext_ref[...],
            preferred_element_type=jnp.float32,
        )
        o_ref[...] = s_next.astype(o_ref.dtype)


def gc1_fused(support1, b1, wnext, adj, *, out_dtype=jnp.bfloat16):
    n = adj.shape[0]
    hp = support1.shape[1]
    cp = wnext.shape[1]
    tm = _row_tile(n)
    tk = _k_tile(n)
    return pl.pallas_call(
        _gc1_fused_kernel,
        out_shape=jax.ShapeDtypeStruct((n, cp), out_dtype),
        grid_spec=pltpu.PrefetchScalarGridSpec(
            num_scalar_prefetch=0,
            grid=(n // tm, n // tk),
            in_specs=[
                pl.BlockSpec((tk, hp), lambda i, k: (k, 0)),   # support1 K-tile
                pl.BlockSpec((1, hp), lambda i, k: (0, 0)),    # b1
                pl.BlockSpec((hp, cp), lambda i, k: (0, 0)),   # [W2|W3] padded
                pl.BlockSpec((tm, tk), lambda i, k: (i, k)),   # adj tile
            ],
            out_specs=pl.BlockSpec((tm, cp), lambda i, k: (i, 0)),
            scratch_shapes=[pltpu.VMEM((tm, hp), jnp.float32)],
        ),
        compiler_params=pltpu.CompilerParams(
            dimension_semantics=("parallel", "arbitrary")),
    )(support1, b1, wnext, adj)


# ----------------------------------------------------------------------------
# Kernel 3: fused gc2+gc3 + head:
#   z = adj @ support2 + [b2 | b3]
#   out[:, :nclass]          = log_softmax(z[:, :nclass])
#   out[:, nclass:nclass+2]  = log_softmax(z[:, nclass:nclass+2])
# Padded columns are masked out of the reductions; output slab is lane-dense.
# ----------------------------------------------------------------------------
def _gc23_head_kernel(support_ref, b_ref, adj_ref, o_ref, acc_ref, *, nclass):
    k = pl.program_id(1)

    @pl.when(k == 0)
    def _():
        acc_ref[...] = jnp.zeros_like(acc_ref)

    acc_ref[...] += jnp.dot(
        adj_ref[...], support_ref[...], preferred_element_type=jnp.float32
    )

    @pl.when(k == pl.num_programs(1) - 1)
    def _():
        z = acc_ref[...] + b_ref[...]
        tm, cp = z.shape
        col = lax.broadcasted_iota(jnp.int32, (tm, cp), 1)
        mask1 = col < nclass
        mask2 = jnp.logical_and(col >= nclass, col < nclass + 2)
        neg = jnp.float32(-jnp.inf)

        m1 = jnp.max(jnp.where(mask1, z, neg), axis=1, keepdims=True)
        e1 = jnp.exp(jnp.where(mask1, z - m1, neg))
        lp1 = z - m1 - jnp.log(jnp.sum(e1, axis=1, keepdims=True))

        m2 = jnp.max(jnp.where(mask2, z, neg), axis=1, keepdims=True)
        e2 = jnp.exp(jnp.where(mask2, z - m2, neg))
        lp2 = z - m2 - jnp.log(jnp.sum(e2, axis=1, keepdims=True))

        o_ref[...] = jnp.where(mask1, lp1, jnp.where(mask2, lp2, 0.0))


def gc23_head(support2, b, adj, nclass):
    n = adj.shape[0]
    cp = support2.shape[1]
    tm = _row_tile(n)
    tk = _k_tile(n)
    return pl.pallas_call(
        functools.partial(_gc23_head_kernel, nclass=nclass),
        out_shape=jax.ShapeDtypeStruct((n, cp), jnp.float32),
        grid_spec=pltpu.PrefetchScalarGridSpec(
            num_scalar_prefetch=0,
            grid=(n // tm, n // tk),
            in_specs=[
                pl.BlockSpec((tk, cp), lambda i, k: (k, 0)),   # support2 K-tile
                pl.BlockSpec((1, cp), lambda i, k: (0, 0)),    # [b2|b3] padded
                pl.BlockSpec((tm, tk), lambda i, k: (i, k)),   # adj tile
            ],
            out_specs=pl.BlockSpec((tm, cp), lambda i, k: (i, 0)),
            scratch_shapes=[pltpu.VMEM((tm, cp), jnp.float32)],
        ),
        compiler_params=pltpu.CompilerParams(
            dimension_semantics=("parallel", "arbitrary")),
    )(support2, b, adj)


# ----------------------------------------------------------------------------
# GCN forward (eval mode).
# ----------------------------------------------------------------------------
def gcn_forward(params, x, adj):
    n, nfeat = x.shape
    nhid = params["w1"].shape[1]
    nclass = params["w2"].shape[1]

    # Pad every dim to 128 so all tiles are lane/sublane aligned and grids
    # divide evenly for arbitrary N.  Zero padding is semantically inert:
    # padded adj columns contribute 0, padded rows are sliced off below.
    npad = _round_up(n, LANE)
    fp = _round_up(nfeat, LANE)
    hp = _round_up(nhid, LANE)
    cp = _round_up(nclass + 2, LANE)

    # Lane-pad feature dims and feed bf16 to the MXU; f32 accumulation happens
    # inside the kernels.
    xp = _pad2(x, npad, fp, jnp.bfloat16)
    adjb = _pad2(adj, npad, npad, jnp.bfloat16)
    w1p = _pad2(params["w1"], fp, hp, jnp.bfloat16)
    b1p = jnp.pad(params["b1"].astype(jnp.float32), (0, hp - nhid)).reshape(1, hp)
    wc = jnp.concatenate([params["w2"], params["w3"]], axis=1)   # gc2|gc3 fused
    wcp = _pad2(wc, hp, cp, jnp.bfloat16)
    bc = jnp.concatenate([params["b2"], params["b3"]]).astype(jnp.float32)
    bcp = jnp.pad(bc, (0, cp - (nclass + 2))).reshape(1, cp)

    # support1 = x @ W1  (hoisted; computed once, not per adj row tile)
    s1 = support_matmul(xp, w1p)
    # support2 = relu(adj @ support1 + b1) @ [W2|W3]  (h never hits HBM)
    s2 = gc1_fused(s1, b1p, wcp, adjb)
    # out = log_softmax head of (adj @ support2 + [b2|b3])
    out = gc23_head(s2, bcp, adjb, nclass)

    lp1 = out[:n, :nclass]
    lp2 = out[:n, nclass:nclass + 2]
    plast = jnp.exp(lp1[:, -1])  # softmax(x1)[:, -1] == exp(log_softmax(x1)[:, -1])
    return lp1, lp2, plast


def init_params(key, nfeat, nhid, nclass):
    ks = jax.random.split(key, 6)

    def glorot(k, fan_in, fan_out):
        bound = (6.0 / (fan_in + fan_out)) ** 0.5
        return jax.random.uniform(k, (fan_in, fan_out), jnp.float32, -bound, bound)

    return {
        "w1": glorot(ks[0], nfeat, nhid),
        "b1": jnp.zeros((nhid,), jnp.float32),
        "w2": glorot(ks[1], nhid, nclass),
        "b2": jnp.zeros((nclass,), jnp.float32),
        "w3": glorot(ks[2], nhid, 2),
        "b3": jnp.zeros((2,), jnp.float32),
        # NOTE: self.attention (nfeat*2 -> 1) is unused in forward(); not implemented.
    }


def reference_forward(params, x, adj):
    h = jnp.maximum(adj @ (x @ params["w1"]) + params["b1"], 0.0)
    x1 = adj @ (h @ params["w2"]) + params["b2"]
    x2 = adj @ (h @ params["w3"]) + params["b3"]
    lp1 = jax.nn.log_softmax(x1, axis=1)
    lp2 = jax.nn.log_softmax(x2, axis=1)
    plast = jax.nn.softmax(x1, axis=1)[:, -1]
    return lp1, lp2, plast


if __name__ == "__main__":
    N, nfeat, nhid, nclass = 128, 32, 32, 8

    key = jax.random.PRNGKey(0)
    k_x, k_a, k_p = jax.random.split(key, 3)

    x = jax.random.normal(k_x, (N, nfeat), jnp.float32)

    # Symmetric normalized adjacency with self-loops (dense).
    a = (jax.random.uniform(k_a, (N, N)) < 0.05).astype(jnp.float32)
    a = jnp.maximum(a, a.T) + jnp.eye(N, dtype=jnp.float32)
    deg = jnp.sum(a, axis=1)
    d_inv_sqrt = 1.0 / jnp.sqrt(deg)
    adj = a * d_inv_sqrt[:, None] * d_inv_sqrt[None, :]

    params = init_params(k_p, nfeat, nhid, nclass)

    lp1, lp2, plast = jax.jit(gcn_forward)(params, x, adj)
    jax.block_until_ready((lp1, lp2, plast))

    r1, r2, r3 = reference_forward(params, x, adj)
    assert lp1.shape == (N, nclass) and lp2.shape == (N, 2) and plast.shape == (N,)
    # bf16 MXU inputs vs. f32 reference -> looser tolerance than pure f32.
    assert jnp.allclose(lp1, r1, atol=2e-2, rtol=2e-2), float(jnp.max(jnp.abs(lp1 - r1)))
    assert jnp.allclose(lp2, r2, atol=2e-2, rtol=2e-2), float(jnp.max(jnp.abs(lp2 - r2)))
    assert jnp.allclose(plast, r3, atol=2e-2, rtol=2e-2), float(jnp.max(jnp.abs(plast - r3)))

    print("KERNEL_OK")
</pallas_src>

<mosaic_0001>
module attributes {stable_mosaic.version = 11 : i64} {
  func.func @_support_kernel(%arg0: i32, %arg1: memref<128x128xbf16, #tpu.memory_space<vmem>>, %arg2: memref<128x128xbf16, #tpu.memory_space<vmem>>, %arg3: memref<128x128xbf16, #tpu.memory_space<vmem>>) attributes {dimension_semantics = [#tpu.dimension_semantics<parallel>], iteration_bounds = array<i64: 1>, scalar_prefetch = 0 : i64, scratch_operands = 0 : i64, tpu.core_type = #tpu.core_type<tc>, window_params = [{transform_indices = @transform_0, window_bounds = array<i64: 128, 128>}, {pipeline_mode = #tpu.pipeline_mode<synchronous>, transform_indices = @transform_1, window_bounds = array<i64: 128, 128>}, {transform_indices = @transform_2, window_bounds = array<i64: 128, 128>}]} {
    %c0 = arith.constant 0 : index
    %c0_0 = arith.constant 0 : index
    %0 = vector.load %arg1[%c0, %c0_0] : memref<128x128xbf16, #tpu.memory_space<vmem>>, vector<128x128xbf16>
    %c0_1 = arith.constant 0 : index
    %c0_2 = arith.constant 0 : index
    %1 = vector.load %arg2[%c0_1, %c0_2] : memref<128x128xbf16, #tpu.memory_space<vmem>>, vector<128x128xbf16>
    %cst = arith.constant dense<0.000000e+00> : vector<128x128xf32>
    %2 = tpu.matmul %0, %1, %cst {dimension_numbers = #tpu.dot_dimension_numbers<[1], [0], [0], [1], [0, 0, 1, 1], [], []>} : vector<128x128xbf16>, vector<128x128xbf16>, vector<128x128xf32> -> vector<128x128xf32>
    %3 = arith.truncf %2 : vector<128x128xf32> to vector<128x128xbf16>
    %c0_3 = arith.constant 0 : index
    %c0_4 = arith.constant 0 : index
    %4 = vector.load %arg3[%c0_3, %c0_4] : memref<128x128xbf16, #tpu.memory_space<vmem>>, vector<128x128xbf16>
    tpu.vector_store %arg3[%c0_3, %c0_4], %3 {strides = array<i32>} : memref<128x128xbf16, #tpu.memory_space<vmem>>, vector<128x128xbf16>,
    return
  }
  func.func @transform_0(%arg0: i32) -> (i32, i32) {
    %c0_i32 = arith.constant 0 : i32
    %c0_i32_0 = arith.constant 0 : i32
    return %arg0, %c0_i32 : i32, i32
  }
  func.func @transform_1(%arg0: i32) -> (i32, i32) {
    %c0_i32 = arith.constant 0 : i32
    %c0_i32_0 = arith.constant 0 : i32
    %c0_i32_1 = arith.constant 0 : i32
    return %c0_i32, %c0_i32_0 : i32, i32
  }
  func.func @transform_2(%arg0: i32) -> (i32, i32) {
    %c0_i32 = arith.constant 0 : i32
    %c0_i32_0 = arith.constant 0 : i32
    return %arg0, %c0_i32 : i32, i32
  }
}

module attributes {stable_mosaic.version = 11 : i64} {
  func.func @_gc1_fused_kernel(%arg0: i32, %arg1: i32, %arg2: memref<128x128xbf16, #tpu.memory_space<vmem>>, %arg3: memref<1x128xf32, #tpu.memory_space<vmem>>, %arg4: memref<128x128xbf16, #tpu.memory_space<vmem>>, %arg5: memref<128x128xbf16, #tpu.memory_space<vmem>>, %arg6: memref<128x128xbf16, #tpu.memory_space<vmem>>, %arg7: memref<128x128xf32, #tpu.memory_space<vmem>>) attributes {dimension_semantics = [#tpu.dimension_semantics<parallel>, #tpu.dimension_semantics<arbitrary>], iteration_bounds = array<i64: 1, 1>, scalar_prefetch = 0 : i64, scratch_operands = 1 : i64, tpu.core_type = #tpu.core_type<tc>, window_params = [{transform_indices = @transform_0, window_bounds = array<i64: 128, 128>}, {pipeline_mode = #tpu.pipeline_mode<synchronous>, transform_indices = @transform_1, window_bounds = array<i64: 1, 128>}, {pipeline_mode = #tpu.pipeline_mode<synchronous>, transform_indices = @transform_2, window_bounds = array<i64: 128, 128>}, {transform_indices = @transform_3, window_bounds = array<i64: 128, 128>}, {transform_indices = @transform_4, window_bounds = array<i64: 128, 128>}]} {
    %c0_i32 = arith.constant 0 : i32
    %0 = arith.cmpi eq, %arg1, %c0_i32 : i32
    %1 = arith.extui %0 : i1 to i32
    %c0_i32_0 = arith.constant 0 : i32
    %2 = arith.cmpi ne, %1, %c0_i32_0 : i32
    scf.if %2 {
      %cst_10 = arith.constant 0.000000e+00 : f32
      %12 = vector.broadcast %cst_10 : f32 to vector<128x128xf32>
      %c0_11 = arith.constant 0 : index
      %c0_12 = arith.constant 0 : index
      %13 = vector.load %arg7[%c0_11, %c0_12] : memref<128x128xf32, #tpu.memory_space<vmem>>, vector<128x128xf32>
      tpu.vector_store %arg7[%c0_11, %c0_12], %12 {strides = array<i32>} : memref<128x128xf32, #tpu.memory_space<vmem>>, vector<128x128xf32>,
    } else {
    }
    %c0 = arith.constant 0 : index
    %c0_1 = arith.constant 0 : index
    %3 = vector.load %arg7[%c0, %c0_1] : memref<128x128xf32, #tpu.memory_space<vmem>>, vector<128x128xf32>
    %c0_2 = arith.constant 0 : index
    %c0_3 = arith.constant 0 : index
    %4 = vector.load %arg5[%c0_2, %c0_3] : memref<128x128xbf16, #tpu.memory_space<vmem>>, vector<128x128xbf16>
    %c0_4 = arith.constant 0 : index
    %c0_5 = arith.constant 0 : index
    %5 = vector.load %arg2[%c0_4, %c0_5] : memref<128x128xbf16, #tpu.memory_space<vmem>>, vector<128x128xbf16>
    %cst = arith.constant dense<0.000000e+00> : vector<128x128xf32>
    %6 = tpu.matmul %4, %5, %cst {dimension_numbers = #tpu.dot_dimension_numbers<[1], [0], [0], [1], [0, 0, 1, 1], [], []>} : vector<128x128xbf16>, vector<128x128xbf16>, vector<128x128xf32> -> vector<128x128xf32>
    %7 = arith.addf %3, %6 : vector<128x128xf32>
    %c0_6 = arith.constant 0 : index
    %c0_7 = arith.constant 0 : index
    %8 = vector.load %arg7[%c0_6, %c0_7] : memref<128x128xf32, #tpu.memory_space<vmem>>, vector<128x128xf32>
    tpu.vector_store %arg7[%c0_6, %c0_7], %7 {strides = array<i32>} : memref<128x128xf32, #tpu.memory_space<vmem>>, vector<128x128xf32>,
    %c0_i32_8 = arith.constant 0 : i32
    %9 = arith.cmpi eq, %arg1, %c0_i32_8 : i32
    %10 = arith.extui %9 : i1 to i32
    %c0_i32_9 = arith.constant 0 : i32
    %11 = arith.cmpi ne, %10, %c0_i32_9 : i32
    scf.if %11 {
      %c0_10 = arith.constant 0 : index
      %c0_11 = arith.constant 0 : index
      %12 = vector.load %arg7[%c0_10, %c0_11] : memref<128x128xf32, #tpu.memory_space<vmem>>, vector<128x128xf32>
      %c0_12 = arith.constant 0 : index
      %c0_13 = arith.constant 0 : index
      %13 = vector.load %arg3[%c0_12, %c0_13] : memref<1x128xf32, #tpu.memory_space<vmem>>, vector<1x128xf32>
      %14 = vector.broadcast %13 : vector<1x128xf32> to vector<128x128xf32>
      %15 = arith.addf %12, %14 : vector<128x128xf32>
      %cst_14 = arith.constant 0.000000e+00 : f32
      %16 = vector.broadcast %cst_14 : f32 to vector<128x128xf32>
      %17 = arith.maximumf %15, %16 : vector<128x128xf32>
      %18 = arith.truncf %17 : vector<128x128xf32> to vector<128x128xbf16>
      %c0_15 = arith.constant 0 : index
      %c0_16 = arith.constant 0 : index
      %19 = vector.load %arg4[%c0_15, %c0_16] : memref<128x128xbf16, #tpu.memory_space<vmem>>, vector<128x128xbf16>
      %cst_17 = arith.constant dense<0.000000e+00> : vector<128x128xf32>
      %20 = tpu.matmul %18, %19, %cst_17 {dimension_numbers = #tpu.dot_dimension_numbers<[1], [0], [0], [1], [0, 0, 1, 1], [], []>} : vector<128x128xbf16>, vector<128x128xbf16>, vector<128x128xf32> -> vector<128x128xf32>
      %21 = arith.truncf %20 : vector<128x128xf32> to vector<128x128xbf16>
      %c0_18 = arith.constant 0 : index
      %c0_19 = arith.constant 0 : index
      %22 = vector.load %arg6[%c0_18, %c0_19] : memref<128x128xbf16, #tpu.memory_space<vmem>>, vector<128x128xbf16>
      tpu.vector_store %arg6[%c0_18, %c0_19], %21 {strides = array<i32>} : memref<128x128xbf16, #tpu.memory_space<vmem>>, vector<128x128xbf16>,
    } else {
    }
    return
  }
  func.func @transform_0(%arg0: i32, %arg1: i32) -> (i32, i32) {
    %c0_i32 = arith.constant 0 : i32
    %c0_i32_0 = arith.constant 0 : i32
    return %arg1, %c0_i32 : i32, i32
  }
  func.func @transform_1(%arg0: i32, %arg1: i32) -> (i32, i32) {
    %c0_i32 = arith.constant 0 : i32
    %c0_i32_0 = arith.constant 0 : i32
    %c0_i32_1 = arith.constant 0 : i32
    return %c0_i32, %c0_i32_0 : i32, i32
  }
  func.func @transform_2(%arg0: i32, %arg1: i32) -> (i32, i32) {
    %c0_i32 = arith.constant 0 : i32
    %c0_i32_0 = arith.constant 0 : i32
    %c0_i32_1 = arith.constant 0 : i32
    return %c0_i32, %c0_i32_0 : i32, i32
  }
  func.func @transform_3(%arg0: i32, %arg1: i32) -> (i32, i32) {
    %c0_i32 = arith.constant 0 : i32
    return %arg0, %arg1 : i32, i32
  }
  func.func @transform_4(%arg0: i32, %arg1: i32) -> (i32, i32) {
    %c0_i32 = arith.constant 0 : i32
    %c0_i32_0 = arith.constant 0 : i32
    return %arg0, %c0_i32 : i32, i32
  }
}

module attributes {stable_mosaic.version = 11 : i64} {
  func.func @_gc23_head_kernel(%arg0: i32, %arg1: i32, %arg2: memref<128x128xbf16, #tpu.memory_space<vmem>>, %arg3: memref<1x128xf32, #tpu.memory_space<vmem>>, %arg4: memref<128x128xbf16, #tpu.memory_space<vmem>>, %arg5: memref<128x128xf32, #tpu.memory_space<vmem>>, %arg6: memref<128x128xf32, #tpu.memory_space<vmem>>) attributes {dimension_semantics = [#tpu.dimension_semantics<parallel>, #tpu.dimension_semantics<arbitrary>], iteration_bounds = array<i64: 1, 1>, scalar_prefetch = 0 : i64, scratch_operands = 1 : i64, tpu.core_type = #tpu.core_type<tc>, window_params = [{transform_indices = @transform_0, window_bounds = array<i64: 128, 128>}, {pipeline_mode = #tpu.pipeline_mode<synchronous>, transform_indices = @transform_1, window_bounds = array<i64: 1, 128>}, {transform_indices = @transform_2, window_bounds = array<i64: 128, 128>}, {transform_indices = @transform_3, window_bounds = array<i64: 128, 128>}]} {
    %c0_i32 = arith.constant 0 : i32
    %0 = arith.cmpi eq, %arg1, %c0_i32 : i32
    %1 = arith.extui %0 : i1 to i32
    %c0_i32_0 = arith.constant 0 : i32
    %2 = arith.cmpi ne, %1, %c0_i32_0 : i32
    scf.if %2 {
      %cst_10 = arith.constant 0.000000e+00 : f32
      %12 = vector.broadcast %cst_10 : f32 to vector<128x128xf32>
      %c0_11 = arith.constant 0 : index
      %c0_12 = arith.constant 0 : index
      %13 = vector.load %arg6[%c0_11, %c0_12] : memref<128x128xf32, #tpu.memory_space<vmem>>, vector<128x128xf32>
      tpu.vector_store %arg6[%c0_11, %c0_12], %12 {strides = array<i32>} : memref<128x128xf32, #tpu.memory_space<vmem>>, vector<128x128xf32>,
    } else {
    }
    %c0 = arith.constant 0 : index
    %c0_1 = arith.constant 0 : index
    %3 = vector.load %arg6[%c0, %c0_1] : memref<128x128xf32, #tpu.memory_space<vmem>>, vector<128x128xf32>
    %c0_2 = arith.constant 0 : index
    %c0_3 = arith.constant 0 : index
    %4 = vector.load %arg4[%c0_2, %c0_3] : memref<128x128xbf16, #tpu.memory_space<vmem>>, vector<128x128xbf16>
    %c0_4 = arith.constant 0 : index
    %c0_5 = arith.constant 0 : index
    %5 = vector.load %arg2[%c0_4, %c0_5] : memref<128x128xbf16, #tpu.memory_space<vmem>>, vector<128x128xbf16>
    %cst = arith.constant dense<0.000000e+00> : vector<128x128xf32>
    %6 = tpu.matmul %4, %5, %cst {dimension_numbers = #tpu.dot_dimension_numbers<[1], [0], [0], [1], [0, 0, 1, 1], [], []>} : vector<128x128xbf16>, vector<128x128xbf16>, vector<128x128xf32> -> vector<128x128xf32>
    %7 = arith.addf %3, %6 : vector<128x128xf32>
    %c0_6 = arith.constant 0 : index
    %c0_7 = arith.constant 0 : index
    %8 = vector.load %arg6[%c0_6, %c0_7] : memref<128x128xf32, #tpu.memory_space<vmem>>, vector<128x128xf32>
    tpu.vector_store %arg6[%c0_6, %c0_7], %7 {strides = array<i32>} : memref<128x128xf32, #tpu.memory_space<vmem>>, vector<128x128xf32>,
    %c0_i32_8 = arith.constant 0 : i32
    %9 = arith.cmpi eq, %arg1, %c0_i32_8 : i32
    %10 = arith.extui %9 : i1 to i32
    %c0_i32_9 = arith.constant 0 : i32
    %11 = arith.cmpi ne, %10, %c0_i32_9 : i32
    scf.if %11 {
      %c0_10 = arith.constant 0 : index
      %c0_11 = arith.constant 0 : index
      %12 = vector.load %arg6[%c0_10, %c0_11] : memref<128x128xf32, #tpu.memory_space<vmem>>, vector<128x128xf32>
      %c0_12 = arith.constant 0 : index
      %c0_13 = arith.constant 0 : index
      %13 = vector.load %arg3[%c0_12, %c0_13] : memref<1x128xf32, #tpu.memory_space<vmem>>, vector<1x128xf32>
      %14 = vector.broadcast %13 : vector<1x128xf32> to vector<128x128xf32>
      %15 = arith.addf %12, %14 : vector<128x128xf32>
      %16 = tpu.iota {dimensions = array<i32: 1>} : vector<128x128xi32>
      %c8_i32 = arith.constant 8 : i32
      %17 = vector.broadcast %c8_i32 : i32 to vector<128x128xi32>
      %18 = arith.cmpi slt, %16, %17 : vector<128x128xi32>
      %c8_i32_14 = arith.constant 8 : i32
      %19 = vector.broadcast %c8_i32_14 : i32 to vector<128x128xi32>
      %20 = arith.cmpi sge, %16, %19 : vector<128x128xi32>
      %c10_i32 = arith.constant 10 : i32
      %21 = vector.broadcast %c10_i32 : i32 to vector<128x128xi32>
      %22 = arith.cmpi slt, %16, %21 : vector<128x128xi32>
      %23 = arith.andi %20, %22 : vector<128x128xi1>
      %cst_15 = arith.constant 0xFF800000 : f32
      %24 = vector.broadcast %cst_15 : f32 to vector<128x128xf32>
      %25 = arith.select %18, %15, %24 : vector<128x128xi1>, vector<128x128xf32>
      %cst_16 = arith.constant dense<0xFF800000> : vector<128xf32>
      %26 = vector.multi_reduction <maximumf>, %25, %cst_16 [1] : vector<128x128xf32> to vector<128xf32>
      %27 = vector.shape_cast %26 : vector<128xf32> to vector<128x1xf32>
      %28 = vector.broadcast %27 : vector<128x1xf32> to vector<128x128xf32>
      %29 = arith.subf %15, %28 : vector<128x128xf32>
      %cst_17 = arith.constant 0xFF800000 : f32
      %30 = vector.broadcast %cst_17 : f32 to vector<128x128xf32>
      %31 = arith.select %18, %29, %30 : vector<128x128xi1>, vector<128x128xf32>
      %32 = math.exp %31 : vector<128x128xf32>
      %33 = vector.broadcast %27 : vector<128x1xf32> to vector<128x128xf32>
      %34 = arith.subf %15, %33 : vector<128x128xf32>
      %cst_18 = arith.constant dense<0.000000e+00> : vector<128xf32>
      %35 = vector.multi_reduction <add>, %32, %cst_18 [1] : vector<128x128xf32> to vector<128xf32>
      %36 = vector.shape_cast %35 : vector<128xf32> to vector<128x1xf32>
      %37 = math.log %36 : vector<128x1xf32>
      %38 = vector.broadcast %37 : vector<128x1xf32> to vector<128x128xf32>
      %39 = arith.subf %34, %38 : vector<128x128xf32>
      %cst_19 = arith.constant 0xFF800000 : f32
      %40 = vector.broadcast %cst_19 : f32 to vector<128x128xf32>
      %41 = arith.select %23, %15, %40 : vector<128x128xi1>, vector<128x128xf32>
      %cst_20 = arith.constant dense<0xFF800000> : vector<128xf32>
      %42 = vector.multi_reduction <maximumf>, %41, %cst_20 [1] : vector<128x128xf32> to vector<128xf32>
      %43 = vector.shape_cast %42 : vector<128xf32> to vector<128x1xf32>
      %44 = vector.broadcast %43 : vector<128x1xf32> to vector<128x128xf32>
      %45 = arith.subf %15, %44 : vector<128x128xf32>
      %cst_21 = arith.constant 0xFF800000 : f32
      %46 = vector.broadcast %cst_21 : f32 to vector<128x128xf32>
      %47 = arith.select %23, %45, %46 : vector<128x128xi1>, vector<128x128xf32>
      %48 = math.exp %47 : vector<128x128xf32>
      %49 = vector.broadcast %43 : vector<128x1xf32> to vector<128x128xf32>
      %50 = arith.subf %15, %49 : vector<128x128xf32>
      %cst_22 = arith.constant dense<0.000000e+00> : vector<128xf32>
      %51 = vector.multi_reduction <add>, %48, %cst_22 [1] : vector<128x128xf32> to vector<128xf32>
      %52 = vector.shape_cast %51 : vector<128xf32> to vector<128x1xf32>
      %53 = math.log %52 : vector<128x1xf32>
      %54 = vector.broadcast %53 : vector<128x1xf32> to vector<128x128xf32>
      %55 = arith.subf %50, %54 : vector<128x128xf32>
      %cst_23 = arith.constant 0.000000e+00 : f32
      %56 = vector.broadcast %cst_23 : f32 to vector<128x128xf32>
      %57 = arith.select %23, %55, %56 : vector<128x128xi1>, vector<128x128xf32>
      %58 = arith.select %18, %39, %57 : vector<128x128xi1>, vector<128x128xf32>
      %c0_24 = arith.constant 0 : index
      %c0_25 = arith.constant 0 : index
      %59 = vector.load %arg5[%c0_24, %c0_25] : memref<128x128xf32, #tpu.memory_space<vmem>>, vector<128x128xf32>
      tpu.vector_store %arg5[%c0_24, %c0_25], %58 {strides = array<i32>} : memref<128x128xf32, #tpu.memory_space<vmem>>, vector<128x128xf32>,
    } else {
    }
    return
  }
  func.func @transform_0(%arg0: i32, %arg1: i32) -> (i32, i32) {
    %c0_i32 = arith.constant 0 : i32
    %c0_i32_0 = arith.constant 0 : i32
    return %arg1, %c0_i32 : i32, i32
  }
  func.func @transform_1(%arg0: i32, %arg1: i32) -> (i32, i32) {
    %c0_i32 = arith.constant 0 : i32
    %c0_i32_0 = arith.constant 0 : i32
    %c0_i32_1 = arith.constant 0 : i32
    return %c0_i32, %c0_i32_0 : i32, i32
  }
  func.func @transform_2(%arg0: i32, %arg1: i32) -> (i32, i32) {
    %c0_i32 = arith.constant 0 : i32
    return %arg0, %arg1 : i32, i32
  }
  func.func @transform_3(%arg0: i32, %arg1: i32) -> (i32, i32) {
    %c0_i32 = arith.constant 0 : i32
    %c0_i32_0 = arith.constant 0 : i32
    return %arg0, %c0_i32 : i32, i32
  }
}

</mosaic_0001>

<llo_original>
// kernel: gcn_forward.3
$region0: #{gcn_forward.3}
  #allocation0 [shape = 'u32[]', space=smem, size = 0x4, offset = 0x4, fixed_abs, tag = 'smem constant byte address 0x4 - core index']
  #allocation1 [shape = 'u32[72,128]{1,0:T(1,128)}', space=vmem, size = 0x9000, scoped, tag = 'internal scratch']
  %s0 = inlined_call_operand.vmem [shape: bf16[128,128], index: 0, kind: input, shape index: {}]
  %s1 = inlined_call_operand.vmem [shape: bf16[128,128], index: 1, kind: input, shape index: {}]
  %s2 = inlined_call_operand.vmem [shape: bf16[128,128], index: 2, kind: output, shape index: {}]
  %s3 = sld [smem:[#allocation0]]
  $region18: #{gcn_forward.3} parent=0
    _
  %s5 = ssub.s32 1, %s3
  %s6 = scalar_select 0, %s5, %s3
  // Predicated region
  $region2: #{gcn_forward.3} parent=0 // pred_check
    _
  $region3: #{gcn_forward.3} parent=0 // pred_check_branch
    %8 = sbr.rel (0) target = $region5
  $region4: #{gcn_forward.3} parent=0 // pred_region
    _
  $region5: #{gcn_forward.3} parent=0 // pred_fallthru
    _
  // Predicated region
  $region6: #{gcn_forward.3} parent=0 // pred_check
    _
  $region7: #{gcn_forward.3} parent=0 // pred_check_branch
    %10 = sbr.rel (0) target = $region9
  $region8: #{gcn_forward.3} parent=0 // pred_region
    _
  $region9: #{gcn_forward.3} parent=0 // pred_fallthru
    _
  %v11 = vld [vmem:[%s0] sm:$0xf]
  %v12 = vld [vmem:[%s0 + $0x4] sm:$0xf]
  %v13 = vld [vmem:[%s0 + $0x8] sm:$0xf]
  %v14 = vld [vmem:[%s0 + $0xc] sm:$0xf]
  %v15 = vld [vmem:[%s0 + $0x10] sm:$0xf]
  %v16 = vld [vmem:[%s0 + $0x14] sm:$0xf]
  %v17 = vld [vmem:[%s0 + $0x18] sm:$0xf]
  %v18 = vld [vmem:[%s0 + $0x1c] sm:$0xf]
  %v19 = vld [vmem:[%s0 + $0x20] sm:$0xf]
  %v20 = vld [vmem:[%s0 + $0x24] sm:$0xf]
  %v21 = vld [vmem:[%s0 + $0x28] sm:$0xf]
  %v22 = vld [vmem:[%s0 + $0x2c] sm:$0xf]
  %v23 = vld [vmem:[%s0 + $0x30] sm:$0xf]
  %v24 = vld [vmem:[%s0 + $0x34] sm:$0xf]
  %v25 = vld [vmem:[%s0 + $0x38] sm:$0xf]
  %v26 = vld [vmem:[%s0 + $0x3c] sm:$0xf]
  %v27 = vld [vmem:[%s1] sm:$0xf]
  %v28 = vld [vmem:[%s1 + $0x4] sm:$0xf]
  %v29 = vld [vmem:[%s1 + $0x8] sm:$0xf]
  %v30 = vld [vmem:[%s1 + $0xc] sm:$0xf]
  %v31 = vld [vmem:[%s1 + $0x10] sm:$0xf]
  %v32 = vld [vmem:[%s1 + $0x14] sm:$0xf]
  %v33 = vld [vmem:[%s1 + $0x18] sm:$0xf]
  %v34 = vld [vmem:[%s1 + $0x1c] sm:$0xf]
  %v35 = vld [vmem:[%s1 + $0x20] sm:$0xf]
  %v36 = vld [vmem:[%s1 + $0x24] sm:$0xf]
  %v37 = vld [vmem:[%s1 + $0x28] sm:$0xf]
  %v38 = vld [vmem:[%s1 + $0x2c] sm:$0xf]
  %v39 = vld [vmem:[%s1 + $0x30] sm:$0xf]
  %v40 = vld [vmem:[%s1 + $0x34] sm:$0xf]
  %v41 = vld [vmem:[%s1 + $0x38] sm:$0xf]
  %v42 = vld [vmem:[%s1 + $0x3c] sm:$0xf]
  %v59 = vunpack.c.l.b16 %v11
  %v60 = vunpack.c.l.b16 %v12
  %v61 = vunpack.c.l.b16 %v13
  %v62 = vunpack.c.l.b16 %v14
  %v63 = vunpack.c.l.b16 %v15
  %v64 = vunpack.c.l.b16 %v16
  %v65 = vunpack.c.l.b16 %v17
  %v66 = vunpack.c.l.b16 %v18
  %v67 = vunpack.c.l.b16 %v19
  %v68 = vunpack.c.l.b16 %v20
  %v69 = vunpack.c.l.b16 %v21
  %v70 = vunpack.c.l.b16 %v22
  %v71 = vunpack.c.l.b16 %v23
  %v72 = vunpack.c.l.b16 %v24
  %v73 = vunpack.c.l.b16 %v25
  %v74 = vunpack.c.l.b16 %v26
  %v75 = vpack.c.b16 %v60, %v59
  %v76 = vpack.c.b16 %v62, %v61
  %v77 = vpack.c.b16 %v64, %v63
  %v78 = vpack.c.b16 %v66, %v65
  %v79 = vpack.c.b16 %v68, %v67
  %v80 = vpack.c.b16 %v70, %v69
  %v81 = vpack.c.b16 %v72, %v71
  %v82 = vpack.c.b16 %v74, %v73
  %v107 = vunpack.c.l.b16 %v27
  %v108 = vunpack.c.l.b16 %v28
  %v109 = vunpack.c.l.b16 %v29
  %v110 = vunpack.c.l.b16 %v30
  %v111 = vunpack.c.l.b16 %v31
  %v112 = vunpack.c.l.b16 %v32
  %v113 = vunpack.c.l.b16 %v33
  %v114 = vunpack.c.l.b16 %v34
  %v115 = vunpack.c.l.b16 %v35
  %v116 = vunpack.c.l.b16 %v36
  %v117 = vunpack.c.l.b16 %v37
  %v118 = vunpack.c.l.b16 %v38
  %v119 = vunpack.c.l.b16 %v39
  %v120 = vunpack.c.l.b16 %v40
  %v121 = vunpack.c.l.b16 %v41
  %v122 = vunpack.c.l.b16 %v42
  %v123 = vpack.c.b16 %v108, %v107
  %v124 = vpack.c.b16 %v110, %v109
  %v125 = vpack.c.b16 %v112, %v111
  %v126 = vpack.c.b16 %v114, %v113
  %v127 = vpack.c.b16 %v116, %v115
  %v128 = vpack.c.b16 %v118, %v117
  %v129 = vpack.c.b16 %v120, %v119
  %v130 = vpack.c.b16 %v122, %v121
  %139 = vmatpush.bf16.msra.mxu0 %v130
  %140 = vmatpush.bf16.msra.mxu0 %v129
  %141 = vmatpush.bf16.msra.mxu0 %v128
  %142 = vmatpush.bf16.msra.mxu0 %v127
  %143 = vmatpush.bf16.msra.mxu0 %v126
  %144 = vmatpush.bf16.msra.mxu0 %v125
  %145 = vmatpush.bf16.msra.mxu0 %v124
  %146 = vmatpush.bf16.msra.mxu0 %v123
  %147 = vmatmul.bf16.gmra.mxu0 %v75
  %v148 = vpop.f32.mrf.mxu0
  %v149 = vadd.f32 0.0, %v148
  %v150 = vpop.f32.mrf.mxu0
  %v151 = vadd.f32 0.0, %v150
  %152 = vmatmul.bf16.gmra.mxu0 %v76
  %v153 = vpop.f32.mrf.mxu0
  %v154 = vadd.f32 0.0, %v153
  %v155 = vpop.f32.mrf.mxu0
  %v156 = vadd.f32 0.0, %v155
  %157 = vmatmul.bf16.gmra.mxu0 %v77
  %v158 = vpop.f32.mrf.mxu0
  %v159 = vadd.f32 0.0, %v158
  %v160 = vpop.f32.mrf.mxu0
  %v161 = vadd.f32 0.0, %v160
  %162 = vmatmul.bf16.gmra.mxu0 %v78
  %v163 = vpop.f32.mrf.mxu0
  %v164 = vadd.f32 0.0, %v163
  %v165 = vpop.f32.mrf.mxu0
  %v166 = vadd.f32 0.0, %v165
  %167 = vmatmul.bf16.gmra.mxu0 %v79
  %v168 = vpop.f32.mrf.mxu0
  %v169 = vadd.f32 0.0, %v168
  %v170 = vpop.f32.mrf.mxu0
  %v171 = vadd.f32 0.0, %v170
  %172 = vmatmul.bf16.gmra.mxu0 %v80
  %v173 = vpop.f32.mrf.mxu0
  %v174 = vadd.f32 0.0, %v173
  %v175 = vpop.f32.mrf.mxu0
  %v176 = vadd.f32 0.0, %v175
  %177 = vmatmul.bf16.gmra.mxu0 %v81
  %v178 = vpop.f32.mrf.mxu0
  %v179 = vadd.f32 0.0, %v178
  %v180 = vpop.f32.mrf.mxu0
  %v181 = vadd.f32 0.0, %v180
  %182 = vmatmul.bf16.gmra.mxu0 %v82
  %v183 = vpop.f32.mrf.mxu0
  %v184 = vadd.f32 0.0, %v183
  %v185 = vpop.f32.mrf.mxu0
  %v186 = vadd.f32 0.0, %v185
  %187 = vdwg.mxu0
  %v188 = vpack.c.bf16 %v149, %v149
  %v189 = vpack.c.bf16 %v151, %v151
  %v190 = vpack.c.bf16 %v154, %v154
  %v191 = vpack.c.bf16 %v156, %v156
  %v192 = vpack.c.bf16 %v159, %v159
  %v193 = vpack.c.bf16 %v161, %v161
  %v194 = vpack.c.bf16 %v164, %v164
  %v195 = vpack.c.bf16 %v166, %v166
  %v196 = vpack.c.bf16 %v169, %v169
  %v197 = vpack.c.bf16 %v171, %v171
  %v198 = vpack.c.bf16 %v174, %v174
  %v199 = vpack.c.bf16 %v176, %v176
  %v200 = vpack.c.bf16 %v179, %v179
  %v201 = vpack.c.bf16 %v181, %v181
  %v202 = vpack.c.bf16 %v184, %v184
  %v203 = vpack.c.bf16 %v186, %v186
  %204 = vst [vmem:[%s2] sm:$0xf] %v188
  %205 = vst [vmem:[%s2 + $0x4] sm:$0xf] %v189
  %206 = vst [vmem:[%s2 + $0x8] sm:$0xf] %v190
  %207 = vst [vmem:[%s2 + $0xc] sm:$0xf] %v191
  %208 = vst [vmem:[%s2 + $0x10] sm:$0xf] %v192
  %209 = vst [vmem:[%s2 + $0x14] sm:$0xf] %v193
  %210 = vst [vmem:[%s2 + $0x18] sm:$0xf] %v194
  %211 = vst [vmem:[%s2 + $0x1c] sm:$0xf] %v195
  %212 = vst [vmem:[%s2 + $0x20] sm:$0xf] %v196
  %213 = vst [vmem:[%s2 + $0x24] sm:$0xf] %v197
  %214 = vst [vmem:[%s2 + $0x28] sm:$0xf] %v198
  %215 = vst [vmem:[%s2 + $0x2c] sm:$0xf] %v199
  %216 = vst [vmem:[%s2 + $0x30] sm:$0xf] %v200
  %217 = vst [vmem:[%s2 + $0x34] sm:$0xf] %v201
  %218 = vst [vmem:[%s2 + $0x38] sm:$0xf] %v202
  %219 = vst [vmem:[%s2 + $0x3c] sm:$0xf] %v203
  // Predicated region
  $region10: #{gcn_forward.3} parent=0 // pred_check
    _
  $region11: #{gcn_forward.3} parent=0 // pred_check_branch
    %221 = sbr.rel (0) target = $region13
  $region12: #{gcn_forward.3} parent=0 // pred_region
    _
  $region13: #{gcn_forward.3} parent=0 // pred_fallthru
    _
  // Predicated region
  $region14: #{gcn_forward.3} parent=0 // pred_check
    _
  $region15: #{gcn_forward.3} parent=0 // pred_check_branch
    %223 = sbr.rel (0) target = $region17
  $region16: #{gcn_forward.3} parent=0 // pred_region
    _
  $region17: #{gcn_forward.3} parent=0 // pred_fallthru
    _

// kernel: gcn_forward.4
$region0: #{gcn_forward.4}
  #allocation0 [shape = 'u32[]', space=smem, size = 0x4, offset = 0x4, fixed_abs, tag = 'smem constant byte address 0x4 - core index']
  #allocation1 [shape = 'u32[72,128]{1,0:T(1,128)}', space=vmem, size = 0x9000, scoped, tag = 'internal scratch']
  #allocation2 [shape = 'f32[128,128]{1,0:T(8,128)}', space=vmem, size = 0x10000, scoped, tag = 'scratch operand']
  %s0 = inlined_call_operand.vmem [shape: bf16[128,128], index: 0, kind: input, shape index: {}]
  %s1 = inlined_call_operand.vmem [shape: f32[1,128], index: 1, kind: input, shape index: {}]
  %s2 = inlined_call_operand.vmem [shape: bf16[128,128], index: 2, kind: input, shape index: {}]
  %s3 = inlined_call_operand.vmem [shape: bf16[128,128], index: 3, kind: input, shape index: {}]
  %s4 = inlined_call_operand.vmem [shape: bf16[128,128], index: 4, kind: output, shape index: {}]
  %s5 = sld [smem:[#allocation0]]
  $region34: #{gcn_forward.4} parent=0
    _
  %s7 = ssub.s32 1, %s5
  %s8 = scalar_select 0, %s7, %s5
  // Predicated region
  $region2: #{gcn_forward.4} parent=0 // pred_check
    _
  $region3: #{gcn_forward.4} parent=0 // pred_check_branch
    %10 = sbr.rel (0) target = $region5
  $region4: #{gcn_forward.4} parent=0 // pred_region
    _
  $region5: #{gcn_forward.4} parent=0 // pred_fallthru
    _
  // Predicated region
  $region6: #{gcn_forward.4} parent=0 // pred_check
    _
  $region7: #{gcn_forward.4} parent=0 // pred_check_branch
    %12 = sbr.rel (0) target = $region9
  $region8: #{gcn_forward.4} parent=0 // pred_region
    _
  $region9: #{gcn_forward.4} parent=0 // pred_fallthru
    _
  // Predicated region
  $region10: #{gcn_forward.4} parent=0 // pred_check
    _
  $region11: #{gcn_forward.4} parent=0 // pred_check_branch
    %14 = sbr.rel (0) target = $region13
  $region12: #{gcn_forward.4} parent=0 // pred_region
    _
  $region13: #{gcn_forward.4} parent=0 // pred_fallthru
    _
  // Predicated region
  $region14: #{gcn_forward.4} parent=0 // pred_check
    _
  $region15: #{gcn_forward.4} parent=0 // pred_check_branch
    %16 = sbr.rel (0) target = $region17
  $region16: #{gcn_forward.4} parent=0 // pred_region
    _
  $region17: #{gcn_forward.4} parent=0 // pred_fallthru
    _
  %p17 = scmp.eq.s32.totalorder 0, 0
  // Predicated region
  $region18: #{gcn_forward.4} parent=0 // pred_check
    %p18 = pneg %p17
  $region19: #{gcn_forward.4} parent=0 // pred_check_branch
    %20 = sbr.rel (%p18) target = $region21
  $region20: #{gcn_forward.4} parent=0 // pred_region
    %21 = vst [vmem:[#allocation2] sm:$0xff] 0.0
    %22 = vst [vmem:[#allocation2 + $0x8] sm:$0xff] 0.0
    %23 = vst [vmem:[#allocation2 + $0x10] sm:$0xff] 0.0
    %24 = vst [vmem:[#allocation2 + $0x18] sm:$0xff] 0.0
    %25 = vst [vmem:[#allocation2 + $0x20] sm:$0xff] 0.0
    %26 = vst [vmem:[#allocation2 + $0x28] sm:$0xff] 0.0
    %27 = vst [vmem:[#allocation2 + $0x30] sm:$0xff] 0.0
    %28 = vst [vmem:[#allocation2 + $0x38] sm:$0xff] 0.0
    %29 = vst [vmem:[#allocation2 + $0x40] sm:$0xff] 0.0
    %30 = vst [vmem:[#allocation2 + $0x48] sm:$0xff] 0.0
    %31 = vst [vmem:[#allocation2 + $0x50] sm:$0xff] 0.0
    %32 = vst [vmem:[#allocation2 + $0x58] sm:$0xff] 0.0
    %33 = vst [vmem:[#allocation2 + $0x60] sm:$0xff] 0.0
    %34 = vst [vmem:[#allocation2 + $0x68] sm:$0xff] 0.0
    %35 = vst [vmem:[#allocation2 + $0x70] sm:$0xff] 0.0
    %36 = vst [vmem:[#allocation2 + $0x78] sm:$0xff] 0.0
  $region21: #{gcn_forward.4} parent=0 // pred_fallthru
    _
  %v37 = vld [vmem:[#allocation2] sm:$0xff]
  %v38 = vld [vmem:[#allocation2 + $0x8] sm:$0xff]
  %v39 = vld [vmem:[#allocation2 + $0x10] sm:$0xff]
  %v40 = vld [vmem:[#allocation2 + $0x18] sm:$0xff]
  %v41 = vld [vmem:[#allocation2 + $0x20] sm:$0xff]
  %v42 = vld [vmem:[#allocation2 + $0x28] sm:$0xff]
  %v43 = vld [vmem:[#allocation2 + $0x30] sm:$0xff]
  %v44 = vld [vmem:[#allocation2 + $0x38] sm:$0xff]
  %v45 = vld [vmem:[#allocation2 + $0x40] sm:$0xff]
  %v46 = vld [vmem:[#allocation2 + $0x48] sm:$0xff]
  %v47 = vld [vmem:[#allocation2 + $0x50] sm:$0xff]
  %v48 = vld [vmem:[#allocation2 + $0x58] sm:$0xff]
  %v49 = vld [vmem:[#allocation2 + $0x60] sm:$0xff]
  %v50 = vld [vmem:[#allocation2 + $0x68] sm:$0xff]
  %v51 = vld [vmem:[#allocation2 + $0x70] sm:$0xff]
  %v52 = vld [vmem:[#allocation2 + $0x78] sm:$0xff]
  %v53 = vld [vmem:[%s3] sm:$0xf]
  %v54 = vld [vmem:[%s3 + $0x4] sm:$0xf]
  %v55 = vld [vmem:[%s3 + $0x8] sm:$0xf]
  %v56 = vld [vmem:[%s3 + $0xc] sm:$0xf]
  %v57 = vld [vmem:[%s3 + $0x10] sm:$0xf]
  %v58 = vld [vmem:[%s3 + $0x14] sm:$0xf]
  %v59 = vld [vmem:[%s3 + $0x18] sm:$0xf]
  %v60 = vld [vmem:[%s3 + $0x1c] sm:$0xf]
  %v61 = vld [vmem:[%s3 + $0x20] sm:$0xf]
  %v62 = vld [vmem:[%s3 + $0x24] sm:$0xf]
  %v63 = vld [vmem:[%s3 + $0x28] sm:$0xf]
  %v64 = vld [vmem:[%s3 + $0x2c] sm:$0xf]
  %v65 = vld [vmem:[%s3 + $0x30] sm:$0xf]
  %v66 = vld [vmem:[%s3 + $0x34] sm:$0xf]
  %v67 = vld [vmem:[%s3 + $0x38] sm:$0xf]
  %v68 = vld [vmem:[%s3 + $0x3c] sm:$0xf]
  %v69 = vld [vmem:[%s0] sm:$0xf]
  %v70 = vld [vmem:[%s0 + $0x4] sm:$0xf]
  %v71 = vld [vmem:[%s0 + $0x8] sm:$0xf]
  %v72 = vld [vmem:[%s0 + $0xc] sm:$0xf]
  %v73 = vld [vmem:[%s0 + $0x10] sm:$0xf]
  %v74 = vld [vmem:[%s0 + $0x14] sm:$0xf]
  %v75 = vld [vmem:[%s0 + $0x18] sm:$0xf]
  %v76 = vld [vmem:[%s0 + $0x1c] sm:$0xf]
  %v77 = vld [vmem:[%s0 + $0x20] sm:$0xf]
  %v78 = vld [vmem:[%s0 + $0x24] sm:$0xf]
  %v79 = vld [vmem:[%s0 + $0x28] sm:$0xf]
  %v80 = vld [vmem:[%s0 + $0x2c] sm:$0xf]
  %v81 = vld [vmem:[%s0 + $0x30] sm:$0xf]
  %v82 = vld [vmem:[%s0 + $0x34] sm:$0xf]
  %v83 = vld [vmem:[%s0 + $0x38] sm:$0xf]
  %v84 = vld [vmem:[%s0 + $0x3c] sm:$0xf]
  %v101 = vunpack.c.l.b16 %v53
  %v102 = vunpack.c.l.b16 %v54
  %v103 = vunpack.c.l.b16 %v55
  %v104 = vunpack.c.l.b16 %v56
  %v105 = vunpack.c.l.b16 %v57
  %v106 = vunpack.c.l.b16 %v58
  %v107 = vunpack.c.l.b16 %v59
  %v108 = vunpack.c.l.b16 %v60
  %v109 = vunpack.c.l.b16 %v61
  %v110 = vunpack.c.l.b16 %v62
  %v111 = vunpack.c.l.b16 %v63
  %v112 = vunpack.c.l.b16 %v64
  %v113 = vunpack.c.l.b16 %v65
  %v114 = vunpack.c.l.b16 %v66
  %v115 = vunpack.c.l.b16 %v67
  %v116 = vunpack.c.l.b16 %v68
  %v117 = vpack.c.b16 %v102, %v101
  %v118 = vpack.c.b16 %v104, %v103
  %v119 = vpack.c.b16 %v106, %v105
  %v120 = vpack.c.b16 %v108, %v107
  %v121 = vpack.c.b16 %v110, %v109
  %v122 = vpack.c.b16 %v112, %v111
  %v123 = vpack.c.b16 %v114, %v113
  %v124 = vpack.c.b16 %v116, %v115
  %v149 = vunpack.c.l.b16 %v69
  %v150 = vunpack.c.l.b16 %v70
  %v151 = vunpack.c.l.b16 %v71
  %v152 = vunpack.c.l.b16 %v72
  %v153 = vunpack.c.l.b16 %v73
  %v154 = vunpack.c.l.b16 %v74
  %v155 = vunpack.c.l.b16 %v75
  %v156 = vunpack.c.l.b16 %v76
  %v157 = vunpack.c.l.b16 %v77
  %v158 = vunpack.c.l.b16 %v78
  %v159 = vunpack.c.l.b16 %v79
  %v160 = vunpack.c.l.b16 %v80
  %v161 = vunpack.c.l.b16 %v81
  %v162 = vunpack.c.l.b16 %v82
  %v163 = vunpack.c.l.b16 %v83
  %v164 = vunpack.c.l.b16 %v84
  %v165 = vpack.c.b16 %v150, %v149
  %v166 = vpack.c.b16 %v152, %v151
  %v167 = vpack.c.b16 %v154, %v153
  %v168 = vpack.c.b16 %v156, %v155
  %v169 = vpack.c.b16 %v158, %v157
  %v170 = vpack.c.b16 %v160, %v159
  %v171 = vpack.c.b16 %v162, %v161
  %v172 = vpack.c.b16 %v164, %v163
  %181 = vmatpush.bf16.msra.mxu0 %v172
  %182 = vmatpush.bf16.msra.mxu0 %v171
  %183 = vmatpush.bf16.msra.mxu0 %v170
  %184 = vmatpush.bf16.msra.mxu0 %v169
  %185 = vmatpush.bf16.msra.mxu0 %v168
  %186 = vmatpush.bf16.msra.mxu0 %v167
  %187 = vmatpush.bf16.msra.mxu0 %v166
  %188 = vmatpush.bf16.msra.mxu0 %v165
  %189 = vmatmul.bf16.gmra.mxu0 %v117
  %v190 = vpop.f32.mrf.mxu0
  %v191 = vadd.f32 0.0, %v190
  %v192 = vpop.f32.mrf.mxu0
  %v193 = vadd.f32 0.0, %v192
  %194 = vmatmul.bf16.gmra.mxu0 %v118
  %v195 = vpop.f32.mrf.mxu0
  %v196 = vadd.f32 0.0, %v195
  %v197 = vpop.f32.mrf.mxu0
  %v198 = vadd.f32 0.0, %v197
  %199 = vmatmul.bf16.gmra.mxu0 %v119
  %v200 = vpop.f32.mrf.mxu0
  %v201 = vadd.f32 0.0, %v200
  %v202 = vpop.f32.mrf.mxu0
  %v203 = vadd.f32 0.0, %v202
  %204 = vmatmul.bf16.gmra.mxu0 %v120
  %v205 = vpop.f32.mrf.mxu0
  %v206 = vadd.f32 0.0, %v205
  %v207 = vpop.f32.mrf.mxu0
  %v208 = vadd.f32 0.0, %v207
  %209 = vmatmul.bf16.gmra.mxu0 %v121
  %v210 = vpop.f32.mrf.mxu0
  %v211 = vadd.f32 0.0, %v210
  %v212 = vpop.f32.mrf.mxu0
  %v213 = vadd.f32 0.0, %v212
  %214 = vmatmul.bf16.gmra.mxu0 %v122
  %v215 = vpop.f32.mrf.mxu0
  %v216 = vadd.f32 0.0, %v215
  %v217 = vpop.f32.mrf.mxu0
  %v218 = vadd.f32 0.0, %v217
  %219 = vmatmul.bf16.gmra.mxu0 %v123
  %v220 = vpop.f32.mrf.mxu0
  %v221 = vadd.f32 0.0, %v220
  %v222 = vpop.f32.mrf.mxu0
  %v223 = vadd.f32 0.0, %v222
  %224 = vmatmul.bf16.gmra.mxu0 %v124
  %v225 = vpop.f32.mrf.mxu0
  %v226 = vadd.f32 0.0, %v225
  %v227 = vpop.f32.mrf.mxu0
  %v228 = vadd.f32 0.0, %v227
  %229 = vdwg.mxu0
  %v230 = vadd.f32 %v37, %v191
  %v231 = vadd.f32 %v38, %v193
  %v232 = vadd.f32 %v39, %v196
  %v233 = vadd.f32 %v40, %v198
  %v234 = vadd.f32 %v41, %v201
  %v235 = vadd.f32 %v42, %v203
  %v236 = vadd.f32 %v43, %v206
  %v237 = vadd.f32 %v44, %v208
  %v238 = vadd.f32 %v45, %v211
  %v239 = vadd.f32 %v46, %v213
  %v240 = vadd.f32 %v47, %v216
  %v241 = vadd.f32 %v48, %v218
  %v242 = vadd.f32 %v49, %v221
  %v243 = vadd.f32 %v50, %v223
  %v244 = vadd.f32 %v51, %v226
  %v245 = vadd.f32 %v52, %v228
  %246 = vst [vmem:[#allocation2] sm:$0xff] %v230
  %247 = vst [vmem:[#allocation2 + $0x8] sm:$0xff] %v231
  %248 = vst [vmem:[#allocation2 + $0x10] sm:$0xff] %v232
  %249 = vst [vmem:[#allocation2 + $0x18] sm:$0xff] %v233
  %250 = vst [vmem:[#allocation2 + $0x20] sm:$0xff] %v234
  %251 = vst [vmem:[#allocation2 + $0x28] sm:$0xff] %v235
  %252 = vst [vmem:[#allocation2 + $0x30] sm:$0xff] %v236
  %253 = vst [vmem:[#allocation2 + $0x38] sm:$0xff] %v237
  %254 = vst [vmem:[#allocation2 + $0x40] sm:$0xff] %v238
  %255 = vst [vmem:[#allocation2 + $0x48] sm:$0xff] %v239
  %256 = vst [vmem:[#allocation2 + $0x50] sm:$0xff] %v240
  %257 = vst [vmem:[#allocation2 + $0x58] sm:$0xff] %v241
  %258 = vst [vmem:[#allocation2 + $0x60] sm:$0xff] %v242
  %259 = vst [vmem:[#allocation2 + $0x68] sm:$0xff] %v243
  %260 = vst [vmem:[#allocation2 + $0x70] sm:$0xff] %v244
  %261 = vst [vmem:[#allocation2 + $0x78] sm:$0xff] %v245
  // Predicated region
  $region22: #{gcn_forward.4} parent=0 // pred_check
    %p262 = pneg %p17
  $region23: #{gcn_forward.4} parent=0 // pred_check_branch
    %264 = sbr.rel (%p262) target = $region25
  $region24: #{gcn_forward.4} parent=0 // pred_region
    %v265 = vld [vmem:[#allocation2] sm:$0xff]
    %v266 = vld [vmem:[#allocation2 + $0x8] sm:$0xff]
    %v267 = vld [vmem:[#allocation2 + $0x10] sm:$0xff]
    %v268 = vld [vmem:[#allocation2 + $0x18] sm:$0xff]
    %v269 = vld [vmem:[#allocation2 + $0x20] sm:$0xff]
    %v270 = vld [vmem:[#allocation2 + $0x28] sm:$0xff]
    %v271 = vld [vmem:[#allocation2 + $0x30] sm:$0xff]
    %v272 = vld [vmem:[#allocation2 + $0x38] sm:$0xff]
    %v273 = vld [vmem:[#allocation2 + $0x40] sm:$0xff]
    %v274 = vld [vmem:[#allocation2 + $0x48] sm:$0xff]
    %v275 = vld [vmem:[#allocation2 + $0x50] sm:$0xff]
    %v276 = vld [vmem:[#allocation2 + $0x58] sm:$0xff]
    %v277 = vld [vmem:[#allocation2 + $0x60] sm:$0xff]
    %v278 = vld [vmem:[#allocation2 + $0x68] sm:$0xff]
    %v279 = vld [vmem:[#allocation2 + $0x70] sm:$0xff]
    %v280 = vld [vmem:[#allocation2 + $0x78] sm:$0xff]
    %v281 = vld [vmem:[%s1] sm:$0x1]
    %v283 = vperm.slane %v281, 0
    %v285 = vadd.f32 %v265, %v283
    %v286 = vadd.f32 %v266, %v283
    %v287 = vadd.f32 %v267, %v283
    %v288 = vadd.f32 %v268, %v283
    %v289 = vadd.f32 %v269, %v283
    %v290 = vadd.f32 %v270, %v283
    %v291 = vadd.f32 %v271, %v283
    %v292 = vadd.f32 %v272, %v283
    %v293 = vadd.f32 %v273, %v283
    %v294 = vadd.f32 %v274, %v283
    %v295 = vadd.f32 %v275, %v283
    %v296 = vadd.f32 %v276, %v283
    %v297 = vadd.f32 %v277, %v283
    %v298 = vadd.f32 %v278, %v283
    %v299 = vadd.f32 %v279, %v283
    %v300 = vadd.f32 %v280, %v283
    %v301 = vmax.f32 %v285, 0.0
    %v302 = vmax.f32 %v286, 0.0
    %v303 = vmax.f32 %v287, 0.0
    %v304 = vmax.f32 %v288, 0.0
    %v305 = vmax.f32 %v289, 0.0
    %v306 = vmax.f32 %v290, 0.0
    %v307 = vmax.f32 %v291, 0.0
    %v308 = vmax.f32 %v292, 0.0
    %v309 = vmax.f32 %v293, 0.0
    %v310 = vmax.f32 %v294, 0.0
    %v311 = vmax.f32 %v295, 0.0
    %v312 = vmax.f32 %v296, 0.0
    %v313 = vmax.f32 %v297, 0.0
    %v314 = vmax.f32 %v298, 0.0
    %v315 = vmax.f32 %v299, 0.0
    %v316 = vmax.f32 %v300, 0.0
    %v317 = vpack.c.bf16 %v302, %v301
    %v318 = vpack.c.bf16 %v304, %v303
    %v319 = vpack.c.bf16 %v306, %v305
    %v320 = vpack.c.bf16 %v308, %v307
    %v321 = vpack.c.bf16 %v310, %v309
    %v322 = vpack.c.bf16 %v312, %v311
    %v323 = vpack.c.bf16 %v314, %v313
    %v324 = vpack.c.bf16 %v316, %v315
    %v325 = vld [vmem:[%s2] sm:$0xf]
    %v326 = vld [vmem:[%s2 + $0x4] sm:$0xf]
    %v327 = vld [vmem:[%s2 + $0x8] sm:$0xf]
    %v328 = vld [vmem:[%s2 + $0xc] sm:$0xf]
    %v329 = vld [vmem:[%s2 + $0x10] sm:$0xf]
    %v330 = vld [vmem:[%s2 + $0x14] sm:$0xf]
    %v331 = vld [vmem:[%s2 + $0x18] sm:$0xf]
    %v332 = vld [vmem:[%s2 + $0x1c] sm:$0xf]
    %v333 = vld [vmem:[%s2 + $0x20] sm:$0xf]
    %v334 = vld [vmem:[%s2 + $0x24] sm:$0xf]
    %v335 = vld [vmem:[%s2 + $0x28] sm:$0xf]
    %v336 = vld [vmem:[%s2 + $0x2c] sm:$0xf]
    %v337 = vld [vmem:[%s2 + $0x30] sm:$0xf]
    %v338 = vld [vmem:[%s2 + $0x34] sm:$0xf]
    %v339 = vld [vmem:[%s2 + $0x38] sm:$0xf]
    %v340 = vld [vmem:[%s2 + $0x3c] sm:$0xf]
    %v357 = vunpack.c.l.b16 %v325
    %v358 = vunpack.c.l.b16 %v326
    %v359 = vunpack.c.l.b16 %v327
    %v360 = vunpack.c.l.b16 %v328
    %v361 = vunpack.c.l.b16 %v329
    %v362 = vunpack.c.l.b16 %v330
    %v363 = vunpack.c.l.b16 %v331
    %v364 = vunpack.c.l.b16 %v332
    %v365 = vunpack.c.l.b16 %v333
    %v366 = vunpack.c.l.b16 %v334
    %v367 = vunpack.c.l.b16 %v335
    %v368 = vunpack.c.l.b16 %v336
    %v369 = vunpack.c.l.b16 %v337
    %v370 = vunpack.c.l.b16 %v338
    %v371 = vunpack.c.l.b16 %v339
    %v372 = vunpack.c.l.b16 %v340
    %v373 = vpack.c.b16 %v358, %v357
    %v374 = vpack.c.b16 %v360, %v359
    %v375 = vpack.c.b16 %v362, %v361
    %v376 = vpack.c.b16 %v364, %v363
    %v377 = vpack.c.b16 %v366, %v365
    %v378 = vpack.c.b16 %v368, %v367
    %v379 = vpack.c.b16 %v370, %v369
    %v380 = vpack.c.b16 %v372, %v371
    %389 = vmatpush.bf16.msra.mxu0 %v380
    %390 = vmatpush.bf16.msra.mxu0 %v379
    %391 = vmatpush.bf16.msra.mxu0 %v378
    %392 = vmatpush.bf16.msra.mxu0 %v377
    %393 = vmatpush.bf16.msra.mxu0 %v376
    %394 = vmatpush.bf16.msra.mxu0 %v375
    %395 = vmatpush.bf16.msra.mxu0 %v374
    %396 = vmatpush.bf16.msra.mxu0 %v373
    %397 = vmatmul.bf16.gmra.mxu0 %v317
    %v398 = vpop.f32.mrf.mxu0
    %v399 = vadd.f32 0.0, %v398
    %v400 = vpop.f32.mrf.mxu0
    %v401 = vadd.f32 0.0, %v400
    %402 = vmatmul.bf16.gmra.mxu0 %v318
    %v403 = vpop.f32.mrf.mxu0
    %v404 = vadd.f32 0.0, %v403
    %v405 = vpop.f32.mrf.mxu0
    %v406 = vadd.f32 0.0, %v405
    %407 = vmatmul.bf16.gmra.mxu0 %v319
    %v408 = vpop.f32.mrf.mxu0
    %v409 = vadd.f32 0.0, %v408
    %v410 = vpop.f32.mrf.mxu0
    %v411 = vadd.f32 0.0, %v410
    %412 = vmatmul.bf16.gmra.mxu0 %v320
    %v413 = vpop.f32.mrf.mxu0
    %v414 = vadd.f32 0.0, %v413
    %v415 = vpop.f32.mrf.mxu0
    %v416 = vadd.f32 0.0, %v415
    %417 = vmatmul.bf16.gmra.mxu0 %v321
    %v418 = vpop.f32.mrf.mxu0
    %v419 = vadd.f32 0.0, %v418
    %v420 = vpop.f32.mrf.mxu0
    %v421 = vadd.f32 0.0, %v420
    %422 = vmatmul.bf16.gmra.mxu0 %v322
    %v423 = vpop.f32.mrf.mxu0
    %v424 = vadd.f32 0.0, %v423
    %v425 = vpop.f32.mrf.mxu0
    %v426 = vadd.f32 0.0, %v425
    %427 = vmatmul.bf16.gmra.mxu0 %v323
    %v428 = vpop.f32.mrf.mxu0
    %v429 = vadd.f32 0.0, %v428
    %v430 = vpop.f32.mrf.mxu0
    %v431 = vadd.f32 0.0, %v430
    %432 = vmatmul.bf16.gmra.mxu0 %v324
    %v433 = vpop.f32.mrf.mxu0
    %v434 = vadd.f32 0.0, %v433
    %v435 = vpop.f32.mrf.mxu0
    %v436 = vadd.f32 0.0, %v435
    %437 = vdwg.mxu0
    %v438 = vpack.c.bf16 %v399, %v399
    %v439 = vpack.c.bf16 %v401, %v401
    %v440 = vpack.c.bf16 %v404, %v404
    %v441 = vpack.c.bf16 %v406, %v406
    %v442 = vpack.c.bf16 %v409, %v409
    %v443 = vpack.c.bf16 %v411, %v411
    %v444 = vpack.c.bf16 %v414, %v414
    %v445 = vpack.c.bf16 %v416, %v416
    %v446 = vpack.c.bf16 %v419, %v419
    %v447 = vpack.c.bf16 %v421, %v421
    %v448 = vpack.c.bf16 %v424, %v424
    %v449 = vpack.c.bf16 %v426, %v426
    %v450 = vpack.c.bf16 %v429, %v429
    %v451 = vpack.c.bf16 %v431, %v431
    %v452 = vpack.c.bf16 %v434, %v434
    %v453 = vpack.c.bf16 %v436, %v436
    %454 = vst [vmem:[%s4] sm:$0xf] %v438
    %455 = vst [vmem:[%s4 + $0x4] sm:$0xf] %v439
    %456 = vst [vmem:[%s4 + $0x8] sm:$0xf] %v440
    %457 = vst [vmem:[%s4 + $0xc] sm:$0xf] %v441
    %458 = vst [vmem:[%s4 + $0x10] sm:$0xf] %v442
    %459 = vst [vmem:[%s4 + $0x14] sm:$0xf] %v443
    %460 = vst [vmem:[%s4 + $0x18] sm:$0xf] %v444
    %461 = vst [vmem:[%s4 + $0x1c] sm:$0xf] %v445
    %462 = vst [vmem:[%s4 + $0x20] sm:$0xf] %v446
    %463 = vst [vmem:[%s4 + $0x24] sm:$0xf] %v447
    %464 = vst [vmem:[%s4 + $0x28] sm:$0xf] %v448
    %465 = vst [vmem:[%s4 + $0x2c] sm:$0xf] %v449
    %466 = vst [vmem:[%s4 + $0x30] sm:$0xf] %v450
    %467 = vst [vmem:[%s4 + $0x34] sm:$0xf] %v451
    %468 = vst [vmem:[%s4 + $0x38] sm:$0xf] %v452
    %469 = vst [vmem:[%s4 + $0x3c] sm:$0xf] %v453
  $region25: #{gcn_forward.4} parent=0 // pred_fallthru
    _
  // Predicated region
  $region26: #{gcn_forward.4} parent=0 // pred_check
    _
  $region27: #{gcn_forward.4} parent=0 // pred_check_branch
    %471 = sbr.rel (0) target = $region29
  $region28: #{gcn_forward.4} parent=0 // pred_region
    _
  $region29: #{gcn_forward.4} parent=0 // pred_fallthru
    _
  // Predicated region
  $region30: #{gcn_forward.4} parent=0 // pred_check
    _
  $region31: #{gcn_forward.4} parent=0 // pred_check_branch
    %473 = sbr.rel (0) target = $region33
  $region32: #{gcn_forward.4} parent=0 // pred_region
    _
  $region33: #{gcn_forward.4} parent=0 // pred_fallthru
    _

// kernel: gcn_forward.5
$region0: #{gcn_forward.5}
  #allocation0 [shape = 'u32[]', space=smem, size = 0x4, offset = 0x4, fixed_abs, tag = 'smem constant byte address 0x4 - core index']
  #allocation1 [shape = 'u32[72,128]{1,0:T(1,128)}', space=vmem, size = 0x9000, scoped, tag = 'internal scratch']
  #allocation2 [shape = 'f32[128,128]{1,0:T(8,128)}', space=vmem, size = 0x10000, scoped, tag = 'scratch operand']
  %s0 = inlined_call_operand.vmem [shape: bf16[128,128], index: 0, kind: input, shape index: {}]
  %s1 = inlined_call_operand.vmem [shape: f32[1,128], index: 1, kind: input, shape index: {}]
  %s2 = inlined_call_operand.vmem [shape: bf16[128,128], index: 2, kind: input, shape index: {}]
  %s3 = inlined_call_operand.vmem [shape: f32[128,128], index: 3, kind: output, shape index: {}]
  %s4 = sld [smem:[#allocation0]]
  $region30: #{gcn_forward.5} parent=0
    _
  %s6 = ssub.s32 1, %s4
  %s7 = scalar_select 0, %s6, %s4
  // Predicated region
  $region2: #{gcn_forward.5} parent=0 // pred_check
    _
  $region3: #{gcn_forward.5} parent=0 // pred_check_branch
    %9 = sbr.rel (0) target = $region5
  $region4: #{gcn_forward.5} parent=0 // pred_region
    _
  $region5: #{gcn_forward.5} parent=0 // pred_fallthru
    _
  // Predicated region
  $region6: #{gcn_forward.5} parent=0 // pred_check
    _
  $region7: #{gcn_forward.5} parent=0 // pred_check_branch
    %11 = sbr.rel (0) target = $region9
  $region8: #{gcn_forward.5} parent=0 // pred_region
    _
  $region9: #{gcn_forward.5} parent=0 // pred_fallthru
    _
  // Predicated region
  $region10: #{gcn_forward.5} parent=0 // pred_check
    _
  $region11: #{gcn_forward.5} parent=0 // pred_check_branch
    %13 = sbr.rel (0) target = $region13
  $region12: #{gcn_forward.5} parent=0 // pred_region
    _
  $region13: #{gcn_forward.5} parent=0 // pred_fallthru
    _
  %p14 = scmp.eq.s32.totalorder 0, 0
  // Predicated region
  $region14: #{gcn_forward.5} parent=0 // pred_check
    %p15 = pneg %p14
  $region15: #{gcn_forward.5} parent=0 // pred_check_branch
    %17 = sbr.rel (%p15) target = $region17
  $region16: #{gcn_forward.5} parent=0 // pred_region
    %18 = vst [vmem:[#allocation2] sm:$0xff] 0.0
    %19 = vst [vmem:[#allocation2 + $0x8] sm:$0xff] 0.0
    %20 = vst [vmem:[#allocation2 + $0x10] sm:$0xff] 0.0
    %21 = vst [vmem:[#allocation2 + $0x18] sm:$0xff] 0.0
    %22 = vst [vmem:[#allocation2 + $0x20] sm:$0xff] 0.0
    %23 = vst [vmem:[#allocation2 + $0x28] sm:$0xff] 0.0
    %24 = vst [vmem:[#allocation2 + $0x30] sm:$0xff] 0.0
    %25 = vst [vmem:[#allocation2 + $0x38] sm:$0xff] 0.0
    %26 = vst [vmem:[#allocation2 + $0x40] sm:$0xff] 0.0
    %27 = vst [vmem:[#allocation2 + $0x48] sm:$0xff] 0.0
    %28 = vst [vmem:[#allocation2 + $0x50] sm:$0xff] 0.0
    %29 = vst [vmem:[#allocation2 + $0x58] sm:$0xff] 0.0
    %30 = vst [vmem:[#allocation2 + $0x60] sm:$0xff] 0.0
    %31 = vst [vmem:[#allocation2 + $0x68] sm:$0xff] 0.0
    %32 = vst [vmem:[#allocation2 + $0x70] sm:$0xff] 0.0
    %33 = vst [vmem:[#allocation2 + $0x78] sm:$0xff] 0.0
  $region17: #{gcn_forward.5} parent=0 // pred_fallthru
    _
  %v34 = vld [vmem:[#allocation2] sm:$0xff]
  %v35 = vld [vmem:[#allocation2 + $0x8] sm:$0xff]
  %v36 = vld [vmem:[#allocation2 + $0x10] sm:$0xff]
  %v37 = vld [vmem:[#allocation2 + $0x18] sm:$0xff]
  %v38 = vld [vmem:[#allocation2 + $0x20] sm:$0xff]
  %v39 = vld [vmem:[#allocation2 + $0x28] sm:$0xff]
  %v40 = vld [vmem:[#allocation2 + $0x30] sm:$0xff]
  %v41 = vld [vmem:[#allocation2 + $0x38] sm:$0xff]
  %v42 = vld [vmem:[#allocation2 + $0x40] sm:$0xff]
  %v43 = vld [vmem:[#allocation2 + $0x48] sm:$0xff]
  %v44 = vld [vmem:[#allocation2 + $0x50] sm:$0xff]
  %v45 = vld [vmem:[#allocation2 + $0x58] sm:$0xff]
  %v46 = vld [vmem:[#allocation2 + $0x60] sm:$0xff]
  %v47 = vld [vmem:[#allocation2 + $0x68] sm:$0xff]
  %v48 = vld [vmem:[#allocation2 + $0x70] sm:$0xff]
  %v49 = vld [vmem:[#allocation2 + $0x78] sm:$0xff]
  %v50 = vld [vmem:[%s2] sm:$0xf]
  %v51 = vld [vmem:[%s2 + $0x4] sm:$0xf]
  %v52 = vld [vmem:[%s2 + $0x8] sm:$0xf]
  %v53 = vld [vmem:[%s2 + $0xc] sm:$0xf]
  %v54 = vld [vmem:[%s2 + $0x10] sm:$0xf]
  %v55 = vld [vmem:[%s2 + $0x14] sm:$0xf]
  %v56 = vld [vmem:[%s2 + $0x18] sm:$0xf]
  %v57 = vld [vmem:[%s2 + $0x1c] sm:$0xf]
  %v58 = vld [vmem:[%s2 + $0x20] sm:$0xf]
  %v59 = vld [vmem:[%s2 + $0x24] sm:$0xf]
  %v60 = vld [vmem:[%s2 + $0x28] sm:$0xf]
  %v61 = vld [vmem:[%s2 + $0x2c] sm:$0xf]
  %v62 = vld [vmem:[%s2 + $0x30] sm:$0xf]
  %v63 = vld [vmem:[%s2 + $0x34] sm:$0xf]
  %v64 = vld [vmem:[%s2 + $0x38] sm:$0xf]
  %v65 = vld [vmem:[%s2 + $0x3c] sm:$0xf]
  %v66 = vld [vmem:[%s0] sm:$0xf]
  %v67 = vld [vmem:[%s0 + $0x4] sm:$0xf]
  %v68 = vld [vmem:[%s0 + $0x8] sm:$0xf]
  %v69 = vld [vmem:[%s0 + $0xc] sm:$0xf]
  %v70 = vld [vmem:[%s0 + $0x10] sm:$0xf]
  %v71 = vld [vmem:[%s0 + $0x14] sm:$0xf]
  %v72 = vld [vmem:[%s0 + $0x18] sm:$0xf]
  %v73 = vld [vmem:[%s0 + $0x1c] sm:$0xf]
  %v74 = vld [vmem:[%s0 + $0x20] sm:$0xf]
  %v75 = vld [vmem:[%s0 + $0x24] sm:$0xf]
  %v76 = vld [vmem:[%s0 + $0x28] sm:$0xf]
  %v77 = vld [vmem:[%s0 + $0x2c] sm:$0xf]
  %v78 = vld [vmem:[%s0 + $0x30] sm:$0xf]
  %v79 = vld [vmem:[%s0 + $0x34] sm:$0xf]
  %v80 = vld [vmem:[%s0 + $0x38] sm:$0xf]
  %v81 = vld [vmem:[%s0 + $0x3c] sm:$0xf]
  %v98 = vunpack.c.l.b16 %v50
  %v99 = vunpack.c.l.b16 %v51
  %v100 = vunpack.c.l.b16 %v52
  %v101 = vunpack.c.l.b16 %v53
  %v102 = vunpack.c.l.b16 %v54
  %v103 = vunpack.c.l.b16 %v55
  %v104 = vunpack.c.l.b16 %v56
  %v105 = vunpack.c.l.b16 %v57
  %v106 = vunpack.c.l.b16 %v58
  %v107 = vunpack.c.l.b16 %v59
  %v108 = vunpack.c.l.b16 %v60
  %v109 = vunpack.c.l.b16 %v61
  %v110 = vunpack.c.l.b16 %v62
  %v111 = vunpack.c.l.b16 %v63
  %v112 = vunpack.c.l.b16 %v64
  %v113 = vunpack.c.l.b16 %v65
  %v114 = vpack.c.b16 %v99, %v98
  %v115 = vpack.c.b16 %v101, %v100
  %v116 = vpack.c.b16 %v103, %v102
  %v117 = vpack.c.b16 %v105, %v104
  %v118 = vpack.c.b16 %v107, %v106
  %v119 = vpack.c.b16 %v109, %v108
  %v120 = vpack.c.b16 %v111, %v110
  %v121 = vpack.c.b16 %v113, %v112
  %v146 = vunpack.c.l.b16 %v66
  %v147 = vunpack.c.l.b16 %v67
  %v148 = vunpack.c.l.b16 %v68
  %v149 = vunpack.c.l.b16 %v69
  %v150 = vunpack.c.l.b16 %v70
  %v151 = vunpack.c.l.b16 %v71
  %v152 = vunpack.c.l.b16 %v72
  %v153 = vunpack.c.l.b16 %v73
  %v154 = vunpack.c.l.b16 %v74
  %v155 = vunpack.c.l.b16 %v75
  %v156 = vunpack.c.l.b16 %v76
  %v157 = vunpack.c.l.b16 %v77
  %v158 = vunpack.c.l.b16 %v78
  %v159 = vunpack.c.l.b16 %v79
  %v160 = vunpack.c.l.b16 %v80
  %v161 = vunpack.c.l.b16 %v81
  %v162 = vpack.c.b16 %v147, %v146
  %v163 = vpack.c.b16 %v149, %v148
  %v164 = vpack.c.b16 %v151, %v150
  %v165 = vpack.c.b16 %v153, %v152
  %v166 = vpack.c.b16 %v155, %v154
  %v167 = vpack.c.b16 %v157, %v156
  %v168 = vpack.c.b16 %v159, %v158
  %v169 = vpack.c.b16 %v161, %v160
  %178 = vmatpush.bf16.msra.mxu0 %v169
  %179 = vmatpush.bf16.msra.mxu0 %v168
  %180 = vmatpush.bf16.msra.mxu0 %v167
  %181 = vmatpush.bf16.msra.mxu0 %v166
  %182 = vmatpush.bf16.msra.mxu0 %v165
  %183 = vmatpush.bf16.msra.mxu0 %v164
  %184 = vmatpush.bf16.msra.mxu0 %v163
  %185 = vmatpush.bf16.msra.mxu0 %v162
  %186 = vmatmul.bf16.gmra.mxu0 %v114
  %v187 = vpop.f32.mrf.mxu0
  %v188 = vadd.f32 0.0, %v187
  %v189 = vpop.f32.mrf.mxu0
  %v190 = vadd.f32 0.0, %v189
  %191 = vmatmul.bf16.gmra.mxu0 %v115
  %v192 = vpop.f32.mrf.mxu0
  %v193 = vadd.f32 0.0, %v192
  %v194 = vpop.f32.mrf.mxu0
  %v195 = vadd.f32 0.0, %v194
  %196 = vmatmul.bf16.gmra.mxu0 %v116
  %v197 = vpop.f32.mrf.mxu0
  %v198 = vadd.f32 0.0, %v197
  %v199 = vpop.f32.mrf.mxu0
  %v200 = vadd.f32 0.0, %v199
  %201 = vmatmul.bf16.gmra.mxu0 %v117
  %v202 = vpop.f32.mrf.mxu0
  %v203 = vadd.f32 0.0, %v202
  %v204 = vpop.f32.mrf.mxu0
  %v205 = vadd.f32 0.0, %v204
  %206 = vmatmul.bf16.gmra.mxu0 %v118
  %v207 = vpop.f32.mrf.mxu0
  %v208 = vadd.f32 0.0, %v207
  %v209 = vpop.f32.mrf.mxu0
  %v210 = vadd.f32 0.0, %v209
  %211 = vmatmul.bf16.gmra.mxu0 %v119
  %v212 = vpop.f32.mrf.mxu0
  %v213 = vadd.f32 0.0, %v212
  %v214 = vpop.f32.mrf.mxu0
  %v215 = vadd.f32 0.0, %v214
  %216 = vmatmul.bf16.gmra.mxu0 %v120
  %v217 = vpop.f32.mrf.mxu0
  %v218 = vadd.f32 0.0, %v217
  %v219 = vpop.f32.mrf.mxu0
  %v220 = vadd.f32 0.0, %v219
  %221 = vmatmul.bf16.gmra.mxu0 %v121
  %v222 = vpop.f32.mrf.mxu0
  %v223 = vadd.f32 0.0, %v222
  %v224 = vpop.f32.mrf.mxu0
  %v225 = vadd.f32 0.0, %v224
  %226 = vdwg.mxu0
  %v227 = vadd.f32 %v34, %v188
  %v228 = vadd.f32 %v35, %v190
  %v229 = vadd.f32 %v36, %v193
  %v230 = vadd.f32 %v37, %v195
  %v231 = vadd.f32 %v38, %v198
  %v232 = vadd.f32 %v39, %v200
  %v233 = vadd.f32 %v40, %v203
  %v234 = vadd.f32 %v41, %v205
  %v235 = vadd.f32 %v42, %v208
  %v236 = vadd.f32 %v43, %v210
  %v237 = vadd.f32 %v44, %v213
  %v238 = vadd.f32 %v45, %v215
  %v239 = vadd.f32 %v46, %v218
  %v240 = vadd.f32 %v47, %v220
  %v241 = vadd.f32 %v48, %v223
  %v242 = vadd.f32 %v49, %v225
  %243 = vst [vmem:[#allocation2] sm:$0xff] %v227
  %244 = vst [vmem:[#allocation2 + $0x8] sm:$0xff] %v228
  %245 = vst [vmem:[#allocation2 + $0x10] sm:$0xff] %v229
  %246 = vst [vmem:[#allocation2 + $0x18] sm:$0xff] %v230
  %247 = vst [vmem:[#allocation2 + $0x20] sm:$0xff] %v231
  %248 = vst [vmem:[#allocation2 + $0x28] sm:$0xff] %v232
  %249 = vst [vmem:[#allocation2 + $0x30] sm:$0xff] %v233
  %250 = vst [vmem:[#allocation2 + $0x38] sm:$0xff] %v234
  %251 = vst [vmem:[#allocation2 + $0x40] sm:$0xff] %v235
  %252 = vst [vmem:[#allocation2 + $0x48] sm:$0xff] %v236
  %253 = vst [vmem:[#allocation2 + $0x50] sm:$0xff] %v237
  %254 = vst [vmem:[#allocation2 + $0x58] sm:$0xff] %v238
  %255 = vst [vmem:[#allocation2 + $0x60] sm:$0xff] %v239
  %256 = vst [vmem:[#allocation2 + $0x68] sm:$0xff] %v240
  %257 = vst [vmem:[#allocation2 + $0x70] sm:$0xff] %v241
  %258 = vst [vmem:[#allocation2 + $0x78] sm:$0xff] %v242
  // Predicated region
  $region18: #{gcn_forward.5} parent=0 // pred_check
    %p259 = pneg %p14
  $region19: #{gcn_forward.5} parent=0 // pred_check_branch
    %261 = sbr.rel (%p259) target = $region21
  $region20: #{gcn_forward.5} parent=0 // pred_region
    %v262 = vld [vmem:[#allocation2] sm:$0xff]
    %v263 = vld [vmem:[#allocation2 + $0x8] sm:$0xff]
    %v264 = vld [vmem:[#allocation2 + $0x10] sm:$0xff]
    %v265 = vld [vmem:[#allocation2 + $0x18] sm:$0xff]
    %v266 = vld [vmem:[#allocation2 + $0x20] sm:$0xff]
    %v267 = vld [vmem:[#allocation2 + $0x28] sm:$0xff]
    %v268 = vld [vmem:[#allocation2 + $0x30] sm:$0xff]
    %v269 = vld [vmem:[#allocation2 + $0x38] sm:$0xff]
    %v270 = vld [vmem:[#allocation2 + $0x40] sm:$0xff]
    %v271 = vld [vmem:[#allocation2 + $0x48] sm:$0xff]
    %v272 = vld [vmem:[#allocation2 + $0x50] sm:$0xff]
    %v273 = vld [vmem:[#allocation2 + $0x58] sm:$0xff]
    %v274 = vld [vmem:[#allocation2 + $0x60] sm:$0xff]
    %v275 = vld [vmem:[#allocation2 + $0x68] sm:$0xff]
    %v276 = vld [vmem:[#allocation2 + $0x70] sm:$0xff]
    %v277 = vld [vmem:[#allocation2 + $0x78] sm:$0xff]
    %v278 = vld [vmem:[%s1] sm:$0x1]
    %v280 = vperm.slane %v278, 0
    %v282 = vadd.f32 %v262, %v280
    %v283 = vadd.f32 %v263, %v280
    %v284 = vadd.f32 %v264, %v280
    %v285 = vadd.f32 %v265, %v280
    %v286 = vadd.f32 %v266, %v280
    %v287 = vadd.f32 %v267, %v280
    %v288 = vadd.f32 %v268, %v280
    %v289 = vadd.f32 %v269, %v280
    %v290 = vadd.f32 %v270, %v280
    %v291 = vadd.f32 %v271, %v280
    %v292 = vadd.f32 %v272, %v280
    %v293 = vadd.f32 %v273, %v280
    %v294 = vadd.f32 %v274, %v280
    %v295 = vadd.f32 %v275, %v280
    %v296 = vadd.f32 %v276, %v280
    %v297 = vadd.f32 %v277, %v280
    %v298 = vlaneseq
    %v299 = vand.u32 %v298, 127
    %vm300 = vcmp.lt.s32.totalorder %v299, 8
    %vm301 = vcmp.ge.s32.totalorder %v299, 8
    %vm302 = vcmp.lt.s32.totalorder %v299, 10
    %vm303 = vmand %vm301, %vm302
    %v304 = vsel %vm300, %v282, -inf
    %v305 = vsel %vm300, %v283, -inf
    %v306 = vsel %vm300, %v284, -inf
    %v307 = vsel %vm300, %v285, -inf
    %v308 = vsel %vm300, %v286, -inf
    %v309 = vsel %vm300, %v287, -inf
    %v310 = vsel %vm300, %v288, -inf
    %v311 = vsel %vm300, %v289, -inf
    %v312 = vsel %vm300, %v290, -inf
    %v313 = vsel %vm300, %v291, -inf
    %v314 = vsel %vm300, %v292, -inf
    %v315 = vsel %vm300, %v293, -inf
    %v316 = vsel %vm300, %v294, -inf
    %v317 = vsel %vm300, %v295, -inf
    %v318 = vsel %vm300, %v296, -inf
    %v319 = vsel %vm300, %v297, -inf
    %320 = vmax.xlane.f32.xlu0 %v304
    %v321 = vpop.xlane.xlu0 %320
    %322 = vmax.xlane.f32.xlu0 %v305
    %v323 = vpop.xlane.xlu0 %322
    %324 = vmax.xlane.f32.xlu0 %v306
    %v325 = vpop.xlane.xlu0 %324
    %326 = vmax.xlane.f32.xlu0 %v307
    %v327 = vpop.xlane.xlu0 %326
    %328 = vmax.xlane.f32.xlu0 %v308
    %v329 = vpop.xlane.xlu0 %328
    %330 = vmax.xlane.f32.xlu0 %v309
    %v331 = vpop.xlane.xlu0 %330
    %332 = vmax.xlane.f32.xlu0 %v310
    %v333 = vpop.xlane.xlu0 %332
    %334 = vmax.xlane.f32.xlu0 %v311
    %v335 = vpop.xlane.xlu0 %334
    %336 = vmax.xlane.f32.xlu0 %v312
    %v337 = vpop.xlane.xlu0 %336
    %338 = vmax.xlane.f32.xlu0 %v313
    %v339 = vpop.xlane.xlu0 %338
    %340 = vmax.xlane.f32.xlu0 %v314
    %v341 = vpop.xlane.xlu0 %340
    %342 = vmax.xlane.f32.xlu0 %v315
    %v343 = vpop.xlane.xlu0 %342
    %344 = vmax.xlane.f32.xlu0 %v316
    %v345 = vpop.xlane.xlu0 %344
    %346 = vmax.xlane.f32.xlu0 %v317
    %v347 = vpop.xlane.xlu0 %346
    %348 = vmax.xlane.f32.xlu0 %v318
    %v349 = vpop.xlane.xlu0 %348
    %350 = vmax.xlane.f32.xlu0 %v319
    %v351 = vpop.xlane.xlu0 %350
    %v352 = vsub.f32 %v282, %v321
    %v353 = vsub.f32 %v283, %v323
    %v354 = vsub.f32 %v284, %v325
    %v355 = vsub.f32 %v285, %v327
    %v356 = vsub.f32 %v286, %v329
    %v357 = vsub.f32 %v287, %v331
    %v358 = vsub.f32 %v288, %v333
    %v359 = vsub.f32 %v289, %v335
    %v360 = vsub.f32 %v290, %v337
    %v361 = vsub.f32 %v291, %v339
    %v362 = vsub.f32 %v292, %v341
    %v363 = vsub.f32 %v293, %v343
    %v364 = vsub.f32 %v294, %v345
    %v365 = vsub.f32 %v295, %v347
    %v366 = vsub.f32 %v296, %v349
    %v367 = vsub.f32 %v297, %v351
    %v368 = vsel %vm300, %v352, -inf
    %v369 = vsel %vm300, %v353, -inf
    %v370 = vsel %vm300, %v354, -inf
    %v371 = vsel %vm300, %v355, -inf
    %v372 = vsel %vm300, %v356, -inf
    %v373 = vsel %vm300, %v357, -inf
    %v374 = vsel %vm300, %v358, -inf
    %v375 = vsel %vm300, %v359, -inf
    %v376 = vsel %vm300, %v360, -inf
    %v377 = vsel %vm300, %v361, -inf
    %v378 = vsel %vm300, %v362, -inf
    %v379 = vsel %vm300, %v363, -inf
    %v380 = vsel %vm300, %v364, -inf
    %v381 = vsel %vm300, %v365, -inf
    %v382 = vsel %vm300, %v366, -inf
    %v383 = vsel %vm300, %v367, -inf
    %v384 = vmul.f32 %v368, 1.442695
    %v385 = vpow.pop %v384
    %v386 = vmul.f32 %v369, 1.442695
    %v387 = vpow.pop %v386
    %v388 = vmul.f32 %v370, 1.442695
    %v389 = vpow.pop %v388
    %v390 = vmul.f32 %v371, 1.442695
    %v391 = vpow.pop %v390
    %v392 = vmul.f32 %v372, 1.442695
    %v393 = vpow.pop %v392
    %v394 = vmul.f32 %v373, 1.442695
    %v395 = vpow.pop %v394
    %v396 = vmul.f32 %v374, 1.442695
    %v397 = vpow.pop %v396
    %v398 = vmul.f32 %v375, 1.442695
    %v399 = vpow.pop %v398
    %v400 = vmul.f32 %v376, 1.442695
    %v401 = vpow.pop %v400
    %v402 = vmul.f32 %v377, 1.442695
    %v403 = vpow.pop %v402
    %v404 = vmul.f32 %v378, 1.442695
    %v405 = vpow.pop %v404
    %v406 = vmul.f32 %v379, 1.442695
    %v407 = vpow.pop %v406
    %v408 = vmul.f32 %v380, 1.442695
    %v409 = vpow.pop %v408
    %v410 = vmul.f32 %v381, 1.442695
    %v411 = vpow.pop %v410
    %v412 = vmul.f32 %v382, 1.442695
    %v413 = vpow.pop %v412
    %v414 = vmul.f32 %v383, 1.442695
    %v415 = vpow.pop %v414
    %416 = vadd.xlane.f32.xlu0 %v385
    %v417 = vpop.xlane.xlu0 %416
    %418 = vadd.xlane.f32.xlu0 %v387
    %v419 = vpop.xlane.xlu0 %418
    %420 = vadd.xlane.f32.xlu0 %v389
    %v421 = vpop.xlane.xlu0 %420
    %422 = vadd.xlane.f32.xlu0 %v391
    %v423 = vpop.xlane.xlu0 %422
    %424 = vadd.xlane.f32.xlu0 %v393
    %v425 = vpop.xlane.xlu0 %424
    %426 = vadd.xlane.f32.xlu0 %v395
    %v427 = vpop.xlane.xlu0 %426
    %428 = vadd.xlane.f32.xlu0 %v397
    %v429 = vpop.xlane.xlu0 %428
    %430 = vadd.xlane.f32.xlu0 %v399
    %v431 = vpop.xlane.xlu0 %430
    %432 = vadd.xlane.f32.xlu0 %v401
    %v433 = vpop.xlane.xlu0 %432
    %434 = vadd.xlane.f32.xlu0 %v403
    %v435 = vpop.xlane.xlu0 %434
    %436 = vadd.xlane.f32.xlu0 %v405
    %v437 = vpop.xlane.xlu0 %436
    %438 = vadd.xlane.f32.xlu0 %v407
    %v439 = vpop.xlane.xlu0 %438
    %440 = vadd.xlane.f32.xlu0 %v409
    %v441 = vpop.xlane.xlu0 %440
    %442 = vadd.xlane.f32.xlu0 %v411
    %v443 = vpop.xlane.xlu0 %442
    %444 = vadd.xlane.f32.xlu0 %v413
    %v445 = vpop.xlane.xlu0 %444
    %446 = vadd.xlane.f32.xlu0 %v415
    %v447 = vpop.xlane.xlu0 %446
    %v448 = vlog2.pop %v417
    %v449 = vmul.f32 %v448, 0.6931472
    %v450 = vlog2.pop %v419
    %v451 = vmul.f32 %v450, 0.6931472
    %v452 = vlog2.pop %v421
    %v453 = vmul.f32 %v452, 0.6931472
    %v454 = vlog2.pop %v423
    %v455 = vmul.f32 %v454, 0.6931472
    %v456 = vlog2.pop %v425
    %v457 = vmul.f32 %v456, 0.6931472
    %v458 = vlog2.pop %v427
    %v459 = vmul.f32 %v458, 0.6931472
    %v460 = vlog2.pop %v429
    %v461 = vmul.f32 %v460, 0.6931472
    %v462 = vlog2.pop %v431
    %v463 = vmul.f32 %v462, 0.6931472
    %v464 = vlog2.pop %v433
    %v465 = vmul.f32 %v464, 0.6931472
    %v466 = vlog2.pop %v435
    %v467 = vmul.f32 %v466, 0.6931472
    %v468 = vlog2.pop %v437
    %v469 = vmul.f32 %v468, 0.6931472
    %v470 = vlog2.pop %v439
    %v471 = vmul.f32 %v470, 0.6931472
    %v472 = vlog2.pop %v441
    %v473 = vmul.f32 %v472, 0.6931472
    %v474 = vlog2.pop %v443
    %v475 = vmul.f32 %v474, 0.6931472
    %v476 = vlog2.pop %v445
    %v477 = vmul.f32 %v476, 0.6931472
    %v478 = vlog2.pop %v447
    %v479 = vmul.f32 %v478, 0.6931472
    %v480 = vsub.f32 %v352, %v449
    %v481 = vsub.f32 %v353, %v451
    %v482 = vsub.f32 %v354, %v453
    %v483 = vsub.f32 %v355, %v455
    %v484 = vsub.f32 %v356, %v457
    %v485 = vsub.f32 %v357, %v459
    %v486 = vsub.f32 %v358, %v461
    %v487 = vsub.f32 %v359, %v463
    %v488 = vsub.f32 %v360, %v465
    %v489 = vsub.f32 %v361, %v467
    %v490 = vsub.f32 %v362, %v469
    %v491 = vsub.f32 %v363, %v471
    %v492 = vsub.f32 %v364, %v473
    %v493 = vsub.f32 %v365, %v475
    %v494 = vsub.f32 %v366, %v477
    %v495 = vsub.f32 %v367, %v479
    %v496 = vsel %vm303, %v282, -inf
    %v497 = vsel %vm303, %v283, -inf
    %v498 = vsel %vm303, %v284, -inf
    %v499 = vsel %vm303, %v285, -inf
    %v500 = vsel %vm303, %v286, -inf
    %v501 = vsel %vm303, %v287, -inf
    %v502 = vsel %vm303, %v288, -inf
    %v503 = vsel %vm303, %v289, -inf
    %v504 = vsel %vm303, %v290, -inf
    %v505 = vsel %vm303, %v291, -inf
    %v506 = vsel %vm303, %v292, -inf
    %v507 = vsel %vm303, %v293, -inf
    %v508 = vsel %vm303, %v294, -inf
    %v509 = vsel %vm303, %v295, -inf
    %v510 = vsel %vm303, %v296, -inf
    %v511 = vsel %vm303, %v297, -inf
    %512 = vmax.xlane.f32.xlu0 %v496
    %v513 = vpop.xlane.xlu0 %512
    %514 = vmax.xlane.f32.xlu0 %v497
    %v515 = vpop.xlane.xlu0 %514
    %516 = vmax.xlane.f32.xlu0 %v498
    %v517 = vpop.xlane.xlu0 %516
    %518 = vmax.xlane.f32.xlu0 %v499
    %v519 = vpop.xlane.xlu0 %518
    %520 = vmax.xlane.f32.xlu0 %v500
    %v521 = vpop.xlane.xlu0 %520
    %522 = vmax.xlane.f32.xlu0 %v501
    %v523 = vpop.xlane.xlu0 %522
    %524 = vmax.xlane.f32.xlu0 %v502
    %v525 = vpop.xlane.xlu0 %524
    %526 = vmax.xlane.f32.xlu0 %v503
    %v527 = vpop.xlane.xlu0 %526
    %528 = vmax.xlane.f32.xlu0 %v504
    %v529 = vpop.xlane.xlu0 %528
    %530 = vmax.xlane.f32.xlu0 %v505
    %v531 = vpop.xlane.xlu0 %530
    %532 = vmax.xlane.f32.xlu0 %v506
    %v533 = vpop.xlane.xlu0 %532
    %534 = vmax.xlane.f32.xlu0 %v507
    %v535 = vpop.xlane.xlu0 %534
    %536 = vmax.xlane.f32.xlu0 %v508
    %v537 = vpop.xlane.xlu0 %536
    %538 = vmax.xlane.f32.xlu0 %v509
    %v539 = vpop.xlane.xlu0 %538
    %540 = vmax.xlane.f32.xlu0 %v510
    %v541 = vpop.xlane.xlu0 %540
    %542 = vmax.xlane.f32.xlu0 %v511
    %v543 = vpop.xlane.xlu0 %542
    %v544 = vsub.f32 %v282, %v513
    %v545 = vsub.f32 %v283, %v515
    %v546 = vsub.f32 %v284, %v517
    %v547 = vsub.f32 %v285, %v519
    %v548 = vsub.f32 %v286, %v521
    %v549 = vsub.f32 %v287, %v523
    %v550 = vsub.f32 %v288, %v525
    %v551 = vsub.f32 %v289, %v527
    %v552 = vsub.f32 %v290, %v529
    %v553 = vsub.f32 %v291, %v531
    %v554 = vsub.f32 %v292, %v533
    %v555 = vsub.f32 %v293, %v535
    %v556 = vsub.f32 %v294, %v537
    %v557 = vsub.f32 %v295, %v539
    %v558 = vsub.f32 %v296, %v541
    %v559 = vsub.f32 %v297, %v543
    %v560 = vsel %vm303, %v544, -inf
    %v561 = vsel %vm303, %v545, -inf
    %v562 = vsel %vm303, %v546, -inf
    %v563 = vsel %vm303, %v547, -inf
    %v564 = vsel %vm303, %v548, -inf
    %v565 = vsel %vm303, %v549, -inf
    %v566 = vsel %vm303, %v550, -inf
    %v567 = vsel %vm303, %v551, -inf
    %v568 = vsel %vm303, %v552, -inf
    %v569 = vsel %vm303, %v553, -inf
    %v570 = vsel %vm303, %v554, -inf
    %v571 = vsel %vm303, %v555, -inf
    %v572 = vsel %vm303, %v556, -inf
    %v573 = vsel %vm303, %v557, -inf
    %v574 = vsel %vm303, %v558, -inf
    %v575 = vsel %vm303, %v559, -inf
    %v576 = vmul.f32 %v560, 1.442695
    %v577 = vpow.pop %v576
    %v578 = vmul.f32 %v561, 1.442695
    %v579 = vpow.pop %v578
    %v580 = vmul.f32 %v562, 1.442695
    %v581 = vpow.pop %v580
    %v582 = vmul.f32 %v563, 1.442695
    %v583 = vpow.pop %v582
    %v584 = vmul.f32 %v564, 1.442695
    %v585 = vpow.pop %v584
    %v586 = vmul.f32 %v565, 1.442695
    %v587 = vpow.pop %v586
    %v588 = vmul.f32 %v566, 1.442695
    %v589 = vpow.pop %v588
    %v590 = vmul.f32 %v567, 1.442695
    %v591 = vpow.pop %v590
    %v592 = vmul.f32 %v568, 1.442695
    %v593 = vpow.pop %v592
    %v594 = vmul.f32 %v569, 1.442695
    %v595 = vpow.pop %v594
    %v596 = vmul.f32 %v570, 1.442695
    %v597 = vpow.pop %v596
    %v598 = vmul.f32 %v571, 1.442695
    %v599 = vpow.pop %v598
    %v600 = vmul.f32 %v572, 1.442695
    %v601 = vpow.pop %v600
    %v602 = vmul.f32 %v573, 1.442695
    %v603 = vpow.pop %v602
    %v604 = vmul.f32 %v574, 1.442695
    %v605 = vpow.pop %v604
    %v606 = vmul.f32 %v575, 1.442695
    %v607 = vpow.pop %v606
    %608 = vadd.xlane.f32.xlu0 %v577
    %v609 = vpop.xlane.xlu0 %608
    %610 = vadd.xlane.f32.xlu0 %v579
    %v611 = vpop.xlane.xlu0 %610
    %612 = vadd.xlane.f32.xlu0 %v581
    %v613 = vpop.xlane.xlu0 %612
    %614 = vadd.xlane.f32.xlu0 %v583
    %v615 = vpop.xlane.xlu0 %614
    %616 = vadd.xlane.f32.xlu0 %v585
    %v617 = vpop.xlane.xlu0 %616
    %618 = vadd.xlane.f32.xlu0 %v587
    %v619 = vpop.xlane.xlu0 %618
    %620 = vadd.xlane.f32.xlu0 %v589
    %v621 = vpop.xlane.xlu0 %620
    %622 = vadd.xlane.f32.xlu0 %v591
    %v623 = vpop.xlane.xlu0 %622
    %624 = vadd.xlane.f32.xlu0 %v593
    %v625 = vpop.xlane.xlu0 %624
    %626 = vadd.xlane.f32.xlu0 %v595
    %v627 = vpop.xlane.xlu0 %626
    %628 = vadd.xlane.f32.xlu0 %v597
    %v629 = vpop.xlane.xlu0 %628
    %630 = vadd.xlane.f32.xlu0 %v599
    %v631 = vpop.xlane.xlu0 %630
    %632 = vadd.xlane.f32.xlu0 %v601
    %v633 = vpop.xlane.xlu0 %632
    %634 = vadd.xlane.f32.xlu0 %v603
    %v635 = vpop.xlane.xlu0 %634
    %636 = vadd.xlane.f32.xlu0 %v605
    %v637 = vpop.xlane.xlu0 %636
    %638 = vadd.xlane.f32.xlu0 %v607
    %v639 = vpop.xlane.xlu0 %638
    %v640 = vlog2.pop %v609
    %v641 = vmul.f32 %v640, 0.6931472
    %v642 = vlog2.pop %v611
    %v643 = vmul.f32 %v642, 0.6931472
    %v644 = vlog2.pop %v613
    %v645 = vmul.f32 %v644, 0.6931472
    %v646 = vlog2.pop %v615
    %v647 = vmul.f32 %v646, 0.6931472
    %v648 = vlog2.pop %v617
    %v649 = vmul.f32 %v648, 0.6931472
    %v650 = vlog2.pop %v619
    %v651 = vmul.f32 %v650, 0.6931472
    %v652 = vlog2.pop %v621
    %v653 = vmul.f32 %v652, 0.6931472
    %v654 = vlog2.pop %v623
    %v655 = vmul.f32 %v654, 0.6931472
    %v656 = vlog2.pop %v625
    %v657 = vmul.f32 %v656, 0.6931472
    %v658 = vlog2.pop %v627
    %v659 = vmul.f32 %v658, 0.6931472
    %v660 = vlog2.pop %v629
    %v661 = vmul.f32 %v660, 0.6931472
    %v662 = vlog2.pop %v631
    %v663 = vmul.f32 %v662, 0.6931472
    %v664 = vlog2.pop %v633
    %v665 = vmul.f32 %v664, 0.6931472
    %v666 = vlog2.pop %v635
    %v667 = vmul.f32 %v666, 0.6931472
    %v668 = vlog2.pop %v637
    %v669 = vmul.f32 %v668, 0.6931472
    %v670 = vlog2.pop %v639
    %v671 = vmul.f32 %v670, 0.6931472
    %v672 = vsub.f32 %v544, %v641
    %v673 = vsub.f32 %v545, %v643
    %v674 = vsub.f32 %v546, %v645
    %v675 = vsub.f32 %v547, %v647
    %v676 = vsub.f32 %v548, %v649
    %v677 = vsub.f32 %v549, %v651
    %v678 = vsub.f32 %v550, %v653
    %v679 = vsub.f32 %v551, %v655
    %v680 = vsub.f32 %v552, %v657
    %v681 = vsub.f32 %v553, %v659
    %v682 = vsub.f32 %v554, %v661
    %v683 = vsub.f32 %v555, %v663
    %v684 = vsub.f32 %v556, %v665
    %v685 = vsub.f32 %v557, %v667
    %v686 = vsub.f32 %v558, %v669
    %v687 = vsub.f32 %v559, %v671
    %v688 = vsel %vm303, %v672, 0.0
    %v689 = vsel %vm303, %v673, 0.0
    %v690 = vsel %vm303, %v674, 0.0
    %v691 = vsel %vm303, %v675, 0.0
    %v692 = vsel %vm303, %v676, 0.0
    %v693 = vsel %vm303, %v677, 0.0
    %v694 = vsel %vm303, %v678, 0.0
    %v695 = vsel %vm303, %v679, 0.0
    %v696 = vsel %vm303, %v680, 0.0
    %v697 = vsel %vm303, %v681, 0.0
    %v698 = vsel %vm303, %v682, 0.0
    %v699 = vsel %vm303, %v683, 0.0
    %v700 = vsel %vm303, %v684, 0.0
    %v701 = vsel %vm303, %v685, 0.0
    %v702 = vsel %vm303, %v686, 0.0
    %v703 = vsel %vm303, %v687, 0.0
    %v704 = vsel %vm300, %v480, %v688
    %v705 = vsel %vm300, %v481, %v689
    %v706 = vsel %vm300, %v482, %v690
    %v707 = vsel %vm300, %v483, %v691
    %v708 = vsel %vm300, %v484, %v692
    %v709 = vsel %vm300, %v485, %v693
    %v710 = vsel %vm300, %v486, %v694
    %v711 = vsel %vm300, %v487, %v695
    %v712 = vsel %vm300, %v488, %v696
    %v713 = vsel %vm300, %v489, %v697
    %v714 = vsel %vm300, %v490, %v698
    %v715 = vsel %vm300, %v491, %v699
    %v716 = vsel %vm300, %v492, %v700
    %v717 = vsel %vm300, %v493, %v701
    %v718 = vsel %vm300, %v494, %v702
    %v719 = vsel %vm300, %v495, %v703
    %720 = vst [vmem:[%s3] sm:$0xff] %v704
    %721 = vst [vmem:[%s3 + $0x8] sm:$0xff] %v705
    %722 = vst [vmem:[%s3 + $0x10] sm:$0xff] %v706
    %723 = vst [vmem:[%s3 + $0x18] sm:$0xff] %v707
    %724 = vst [vmem:[%s3 + $0x20] sm:$0xff] %v708
    %725 = vst [vmem:[%s3 + $0x28] sm:$0xff] %v709
    %726 = vst [vmem:[%s3 + $0x30] sm:$0xff] %v710
    %727 = vst [vmem:[%s3 + $0x38] sm:$0xff] %v711
    %728 = vst [vmem:[%s3 + $0x40] sm:$0xff] %v712
    %729 = vst [vmem:[%s3 + $0x48] sm:$0xff] %v713
    %730 = vst [vmem:[%s3 + $0x50] sm:$0xff] %v714
    %731 = vst [vmem:[%s3 + $0x58] sm:$0xff] %v715
    %732 = vst [vmem:[%s3 + $0x60] sm:$0xff] %v716
    %733 = vst [vmem:[%s3 + $0x68] sm:$0xff] %v717
    %734 = vst [vmem:[%s3 + $0x70] sm:$0xff] %v718
    %735 = vst [vmem:[%s3 + $0x78] sm:$0xff] %v719
  $region21: #{gcn_forward.5} parent=0 // pred_fallthru
    _
  // Predicated region
  $region22: #{gcn_forward.5} parent=0 // pred_check
    _
  $region23: #{gcn_forward.5} parent=0 // pred_check_branch
    %737 = sbr.rel (0) target = $region25
  $region24: #{gcn_forward.5} parent=0 // pred_region
    _
  $region25: #{gcn_forward.5} parent=0 // pred_fallthru
    _
  // Predicated region
  $region26: #{gcn_forward.5} parent=0 // pred_check
    _
  $region27: #{gcn_forward.5} parent=0 // pred_check_branch
    %739 = sbr.rel (0) target = $region29
  $region28: #{gcn_forward.5} parent=0 // pred_region
    _
  $region29: #{gcn_forward.5} parent=0 // pred_fallthru
    _

</llo_original>
